<compile_context>
chip_gen: v7x
topology: tpu7x:2x2x1
jax: 0.10.0
libtpu: 0.0.40
codegen_flags: <defaults>
</compile_context>

<pallas_src>
import math
import functools

import numpy as np
import jax
import jax.numpy as jnp
from jax.experimental import pallas as pl
from jax.experimental.pallas import tpu as pltpu


def lcm(x, y):
    return x * y // math.gcd(x, y)


__DownRate__ = {
    'FormerStereo': lcm(28, 32),
    'Former_PSMNet': lcm(28, 16),
    'Former_GwcNet': lcm(28, 16),
    'Former_CFNet': lcm(28, 32),
    'Former_RAFT': lcm(28, 16),
}


def _round_up(x, m):
    return ((x + m - 1) // m) * m


@functools.lru_cache(maxsize=None)
def _interp_matrix_np(n_out: int, n_in: int) -> np.ndarray:
    """Host-precomputed (cached) 1-D interpolation matrix reproducing
    F.interpolate(..., mode='bilinear', align_corners=True) along one axis."""
    if n_out == 1:
        src = np.zeros((1,), np.float64)
    else:
        src = np.arange(n_out, dtype=np.float64) * ((n_in - 1) / (n_out - 1))
    i0 = np.clip(np.floor(src).astype(np.int64), 0, n_in - 1)
    i1 = np.clip(i0 + 1, 0, n_in - 1)
    w1 = src - i0
    w0 = 1.0 - w1
    m = np.zeros((n_out, n_in), np.float64)
    rows = np.arange(n_out)
    np.add.at(m, (rows, i0), w0)
    np.add.at(m, (rows, i1), w1)
    return m.astype(np.float32)


# ----------------------------------------------------------------------------
# Fused eval-path kernel: resize L & R -> backbone stand-in -> restore
# ----------------------------------------------------------------------------
def _fused_eval_kernel(l_ref, r_ref, rh_ref, rwT_ref, sh_ref, swT_ref, o_ref,
                       *, n_ch, inv_c):
    # l_ref/r_ref : (1, C, H, W)  f32  raw images (no wrapper prep pass)
    # rh_ref      : (Hop, H)      f32  resize row-interp matrix (zero pad rows)
    # rwT_ref     : (W, Wop)      f32  resize col-interp^T (zero pad cols)
    # sh_ref      : (H, Hop)      f32  restore row-interp matrix (zero pad cols)
    # swT_ref     : (Wop, Wpo)    f32  restore col-interp^T * (W/Wo), zero pads
    # o_ref       : (1, 1, H, Wpo) f32 lane-dense output slab
    rh = rh_ref[...]
    rwT = rwT_ref[...]

    # TODO(synk): the real backbone (FormerStereo / Former_PSMNet / ...) is
    # dynamically imported in the PyTorch code and its weights are unavailable;
    # this photometric |resize(L) - resize(R)| channel-mean stand-in replaces it.
    acc = None
    for c in range(n_ch):                       # C is tiny & static
        d = l_ref[0, c] - r_ref[0, c]                                   # (H, W) f32 diff first
        t = jnp.dot(rh, d, preferred_element_type=jnp.float32)          # (Hop, W)  row resize
        r = jnp.dot(t, rwT, preferred_element_type=jnp.float32)         # (Hop, Wop) col resize
        a = jnp.abs(r)
        acc = a if acc is None else acc + a

    disp = acc * inv_c                                                   # (Hop, Wop)

    # Restore (downsample back to H, W); scale W/Wo already folded into swT.
    u = jnp.dot(sh_ref[...], disp, preferred_element_type=jnp.float32)   # (H, Wop)
    o_ref[0, 0] = jnp.dot(u, swT_ref[...],
                          preferred_element_type=jnp.float32)            # (H, Wpo)


@functools.partial(jax.jit, static_argnames=("rate",))
def _fused_eval_forward(imgL, imgR, *, rate):
    B, C, H, W = imgL.shape
    Ho = _round_up(H, rate)
    Wo = _round_up(W, rate)
    Hop = _round_up(Ho, 256)      # 256-align for full v6e/v7x MXU tiles
    Wop = _round_up(Wo, 256)
    Wpo = _round_up(W, 128)       # lane-dense output slab width
    scale = W / Wo                # restore scale: self.size[-1] / w

    # Host-built constant matrices (cached), zero-padded so padded rows/cols
    # contribute nothing and all matmul tiles are aligned.
    rh = np.zeros((Hop, H), np.float32)
    rh[:Ho, :] = _interp_matrix_np(Ho, H)
    rwT = np.zeros((W, Wop), np.float32)
    rwT[:, :Wo] = _interp_matrix_np(Wo, W).T
    sh = np.zeros((H, Hop), np.float32)
    sh[:, :Ho] = _interp_matrix_np(H, Ho)
    swT = np.zeros((Wop, Wpo), np.float32)
    swT[:Wo, :W] = _interp_matrix_np(W, Wo).T * scale   # scale folded in

    const_elems = rh.size + rwT.size + sh.size + swT.size
    flops_per_b = (C * (2 * Hop * H * W + 2 * Hop * W * Wop)
                   + 2 * H * Hop * Wop + 2 * H * Wop * Wpo)
    bytes_accessed = 4 * (2 * B * C * H * W + B * H * Wpo + const_elems)

    # Crude live-set estimate -> explicit scoped-VMEM limit (never below the
    # chip defaults, kept safely under v7x's 64 MiB physical VMEM).
    live_bytes = 4 * (2 * 2 * C * H * W          # 2 image blocks x double buffer
                      + 2 * const_elems          # constants (double buffered)
                      + 2 * H * Wpo              # output block x double buffer
                      + Hop * W + 2 * Hop * Wop + H * Wop + H * Wpo)
    vmem_limit = int(min(max(2 * live_bytes, 32 * 2**20), 60 * 2**20))

    # TODO(synk): at production sizes (e.g. H~544, W~960 -> Ho=672, Wo=1120)
    # tile Hop in 256-row chunks (second "arbitrary" grid axis accumulating the
    # sh-contraction) and single-buffer the constant matrices
    # (pipeline_mode=pl.Buffered(1)); also add a second "parallel" axis so both
    # v7x TensorCores are busy when B == 1.  Not needed at these toy shapes.
    out = pl.pallas_call(
        functools.partial(_fused_eval_kernel, n_ch=C, inv_c=1.0 / C),
        out_shape=jax.ShapeDtypeStruct((B, 1, H, Wpo), jnp.float32),
        grid_spec=pltpu.PrefetchScalarGridSpec(
            num_scalar_prefetch=0,
            grid=(B,),
            in_specs=[
                pl.BlockSpec((1, C, H, W), lambda b: (b, 0, 0, 0)),
                pl.BlockSpec((1, C, H, W), lambda b: (b, 0, 0, 0)),
                pl.BlockSpec((Hop, H), lambda b: (0, 0)),
                pl.BlockSpec((W, Wop), lambda b: (0, 0)),
                pl.BlockSpec((H, Hop), lambda b: (0, 0)),
                pl.BlockSpec((Wop, Wpo), lambda b: (0, 0)),
            ],
            out_specs=pl.BlockSpec((1, 1, H, Wpo), lambda b: (b, 0, 0, 0)),
        ),
        compiler_params=pltpu.CompilerParams(
            dimension_semantics=("parallel",),
            vmem_limit_bytes=vmem_limit),
        cost_estimate=pl.CostEstimate(
            flops=int(B * flops_per_b),
            transcendentals=0,
            bytes_accessed=int(bytes_accessed)),
    )(imgL, imgR,
      jnp.asarray(rh), jnp.asarray(rwT), jnp.asarray(sh), jnp.asarray(swT))

    return out[:, :, :, :W]     # drop lane padding -> (B, 1, H, W)


# ----------------------------------------------------------------------------
# Training-path backbone stand-in (not exercised in eval mode)
# ----------------------------------------------------------------------------
def _backbone_kernel(l_ref, r_ref, o_ref, *, n_ch, inv_c):
    # TODO(synk): stand-in for the real importlib-loaded backbone (weights
    # unavailable): photometric |L - R| channel mean.
    acc = None
    for c in range(n_ch):
        a = jnp.abs(l_ref[0, c] - r_ref[0, c])
        acc = a if acc is None else acc + a
    o_ref[0, 0] = acc * inv_c


def backbone_stub(imgL, imgR):
    B, C, H, W = imgL.shape
    disp = pl.pallas_call(
        functools.partial(_backbone_kernel, n_ch=C, inv_c=1.0 / C),
        out_shape=jax.ShapeDtypeStruct((B, 1, H, W), jnp.float32),
        grid_spec=pltpu.PrefetchScalarGridSpec(
            num_scalar_prefetch=0,
            grid=(B,),
            in_specs=[
                pl.BlockSpec((1, C, H, W), lambda b: (b, 0, 0, 0)),
                pl.BlockSpec((1, C, H, W), lambda b: (b, 0, 0, 0)),
            ],
            out_specs=pl.BlockSpec((1, 1, H, W), lambda b: (b, 0, 0, 0)),
        ),
        compiler_params=pltpu.CompilerParams(
            dimension_semantics=("parallel",)),
    )(imgL, imgR)
    return {'disparity': disp}


# ----------------------------------------------------------------------------
# MODEL (eval path = one fused kernel: resize -> backbone -> restore)
# ----------------------------------------------------------------------------
class MODEL:
    def __init__(self, config):
        self.config = config
        model_name = config['model']['name']
        self.rate = __DownRate__[model_name]
        self.training = False  # we implement the eval-mode forward

    def __call__(self, imgL, imgR):
        if self.training:
            return backbone_stub(imgL, imgR)
        disp = _fused_eval_forward(imgL, imgR, rate=self.rate)
        return {'disparity': disp}


if __name__ == "__main__":
    key = jax.random.PRNGKey(0)
    kL, kR = jax.random.split(key)
    # Small, non-multiple-of-rate spatial size so resize/restore are exercised.
    B, C, H, W = 2, 3, 60, 90
    imgL = jax.random.uniform(kL, (B, C, H, W), dtype=jnp.float32)
    imgR = jax.random.uniform(kR, (B, C, H, W), dtype=jnp.float32)

    config = {'model': {'name': 'FormerStereo'}}  # d_rate = lcm(28, 32) = 224
    model = MODEL(config)

    out = model(imgL, imgR)
    disp = jax.block_until_ready(out['disparity'])

    assert disp.shape == (B, 1, H, W), disp.shape
    assert bool(jnp.isfinite(disp).all())
    print("KERNEL_OK")
</pallas_src>

<mosaic_0001>
module attributes {stable_mosaic.version = 11 : i64} {
  func.func @_fused_eval_kernel(%arg0: i32, %arg1: memref<1x3x60x90xf32, #tpu.memory_space<vmem>>, %arg2: memref<1x3x60x90xf32, #tpu.memory_space<vmem>>, %arg3: memref<256x60xf32, #tpu.memory_space<vmem>>, %arg4: memref<90x256xf32, #tpu.memory_space<vmem>>, %arg5: memref<60x256xf32, #tpu.memory_space<vmem>>, %arg6: memref<256x128xf32, #tpu.memory_space<vmem>>, %arg7: memref<1x1x60x128xf32, #tpu.memory_space<vmem>>) attributes {dimension_semantics = [#tpu.dimension_semantics<parallel>], iteration_bounds = array<i64: 2>, scalar_prefetch = 0 : i64, scratch_operands = 0 : i64, tpu.core_type = #tpu.core_type<tc>, window_params = [{transform_indices = @transform_0, window_bounds = array<i64: 1, 3, 60, 90>}, {transform_indices = @transform_1, window_bounds = array<i64: 1, 3, 60, 90>}, {pipeline_mode = #tpu.pipeline_mode<synchronous>, transform_indices = @transform_2, window_bounds = array<i64: 256, 60>}, {pipeline_mode = #tpu.pipeline_mode<synchronous>, transform_indices = @transform_3, window_bounds = array<i64: 90, 256>}, {pipeline_mode = #tpu.pipeline_mode<synchronous>, transform_indices = @transform_4, window_bounds = array<i64: 60, 256>}, {pipeline_mode = #tpu.pipeline_mode<synchronous>, transform_indices = @transform_5, window_bounds = array<i64: 256, 128>}, {transform_indices = @transform_6, window_bounds = array<i64: 1, 1, 60, 128>}]} {
    %c0 = arith.constant 0 : index
    %c0_0 = arith.constant 0 : index
    %0 = vector.load %arg3[%c0, %c0_0] : memref<256x60xf32, #tpu.memory_space<vmem>>, vector<256x60xf32>
    %c0_1 = arith.constant 0 : index
    %c0_2 = arith.constant 0 : index
    %1 = vector.load %arg4[%c0_1, %c0_2] : memref<90x256xf32, #tpu.memory_space<vmem>>, vector<90x256xf32>
    %c0_3 = arith.constant 0 : index
    %c0_4 = arith.constant 0 : index
    %c0_5 = arith.constant 0 : index
    %c0_6 = arith.constant 0 : index
    %2 = vector.load %arg1[%c0_3, %c0_4, %c0_5, %c0_6] : memref<1x3x60x90xf32, #tpu.memory_space<vmem>>, vector<1x1x60x90xf32>
    %3 = vector.shape_cast %2 : vector<1x1x60x90xf32> to vector<60x90xf32>
    %c0_7 = arith.constant 0 : index
    %c0_8 = arith.constant 0 : index
    %c0_9 = arith.constant 0 : index
    %c0_10 = arith.constant 0 : index
    %4 = vector.load %arg2[%c0_7, %c0_8, %c0_9, %c0_10] : memref<1x3x60x90xf32, #tpu.memory_space<vmem>>, vector<1x1x60x90xf32>
    %5 = vector.shape_cast %4 : vector<1x1x60x90xf32> to vector<60x90xf32>
    %6 = arith.subf %3, %5 : vector<60x90xf32>
    %cst = arith.constant dense<0.000000e+00> : vector<256x90xf32>
    %7 = tpu.matmul %0, %6, %cst {dimension_numbers = #tpu.dot_dimension_numbers<[1], [0], [0], [1], [0, 0, 1, 1], [], []>} : vector<256x60xf32>, vector<60x90xf32>, vector<256x90xf32> -> vector<256x90xf32>
    %cst_11 = arith.constant dense<0.000000e+00> : vector<256x256xf32>
    %8 = tpu.matmul %7, %1, %cst_11 {dimension_numbers = #tpu.dot_dimension_numbers<[1], [0], [0], [1], [0, 0, 1, 1], [], []>} : vector<256x90xf32>, vector<90x256xf32>, vector<256x256xf32> -> vector<256x256xf32>
    %9 = math.absf %8 : vector<256x256xf32>
    %c0_12 = arith.constant 0 : index
    %c1 = arith.constant 1 : index
    %c0_13 = arith.constant 0 : index
    %c0_14 = arith.constant 0 : index
    %10 = vector.load %arg1[%c0_12, %c1, %c0_13, %c0_14] : memref<1x3x60x90xf32, #tpu.memory_space<vmem>>, vector<1x1x60x90xf32>
    %11 = vector.shape_cast %10 : vector<1x1x60x90xf32> to vector<60x90xf32>
    %c0_15 = arith.constant 0 : index
    %c1_16 = arith.constant 1 : index
    %c0_17 = arith.constant 0 : index
    %c0_18 = arith.constant 0 : index
    %12 = vector.load %arg2[%c0_15, %c1_16, %c0_17, %c0_18] : memref<1x3x60x90xf32, #tpu.memory_space<vmem>>, vector<1x1x60x90xf32>
    %13 = vector.shape_cast %12 : vector<1x1x60x90xf32> to vector<60x90xf32>
    %14 = arith.subf %11, %13 : vector<60x90xf32>
    %cst_19 = arith.constant dense<0.000000e+00> : vector<256x90xf32>
    %15 = tpu.matmul %0, %14, %cst_19 {dimension_numbers = #tpu.dot_dimension_numbers<[1], [0], [0], [1], [0, 0, 1, 1], [], []>} : vector<256x60xf32>, vector<60x90xf32>, vector<256x90xf32> -> vector<256x90xf32>
    %cst_20 = arith.constant dense<0.000000e+00> : vector<256x256xf32>
    %16 = tpu.matmul %15, %1, %cst_20 {dimension_numbers = #tpu.dot_dimension_numbers<[1], [0], [0], [1], [0, 0, 1, 1], [], []>} : vector<256x90xf32>, vector<90x256xf32>, vector<256x256xf32> -> vector<256x256xf32>
    %17 = math.absf %16 : vector<256x256xf32>
    %18 = arith.addf %9, %17 : vector<256x256xf32>
    %c0_21 = arith.constant 0 : index
    %c2 = arith.constant 2 : index
    %c0_22 = arith.constant 0 : index
    %c0_23 = arith.constant 0 : index
    %19 = vector.load %arg1[%c0_21, %c2, %c0_22, %c0_23] : memref<1x3x60x90xf32, #tpu.memory_space<vmem>>, vector<1x1x60x90xf32>
    %20 = vector.shape_cast %19 : vector<1x1x60x90xf32> to vector<60x90xf32>
    %c0_24 = arith.constant 0 : index
    %c2_25 = arith.constant 2 : index
    %c0_26 = arith.constant 0 : index
    %c0_27 = arith.constant 0 : index
    %21 = vector.load %arg2[%c0_24, %c2_25, %c0_26, %c0_27] : memref<1x3x60x90xf32, #tpu.memory_space<vmem>>, vector<1x1x60x90xf32>
    %22 = vector.shape_cast %21 : vector<1x1x60x90xf32> to vector<60x90xf32>
    %23 = arith.subf %20, %22 : vector<60x90xf32>
    %cst_28 = arith.constant dense<0.000000e+00> : vector<256x90xf32>
    %24 = tpu.matmul %0, %23, %cst_28 {dimension_numbers = #tpu.dot_dimension_numbers<[1], [0], [0], [1], [0, 0, 1, 1], [], []>} : vector<256x60xf32>, vector<60x90xf32>, vector<256x90xf32> -> vector<256x90xf32>
    %cst_29 = arith.constant dense<0.000000e+00> : vector<256x256xf32>
    %25 = tpu.matmul %24, %1, %cst_29 {dimension_numbers = #tpu.dot_dimension_numbers<[1], [0], [0], [1], [0, 0, 1, 1], [], []>} : vector<256x90xf32>, vector<90x256xf32>, vector<256x256xf32> -> vector<256x256xf32>
    %26 = math.absf %25 : vector<256x256xf32>
    %27 = arith.addf %18, %26 : vector<256x256xf32>
    %cst_30 = arith.constant 0.333333343 : f32
    %28 = vector.broadcast %cst_30 : f32 to vector<256x256xf32>
    %29 = arith.mulf %27, %28 : vector<256x256xf32>
    %c0_31 = arith.constant 0 : index
    %c0_32 = arith.constant 0 : index
    %30 = vector.load %arg5[%c0_31, %c0_32] : memref<60x256xf32, #tpu.memory_space<vmem>>, vector<60x256xf32>
    %cst_33 = arith.constant dense<0.000000e+00> : vector<60x256xf32>
    %31 = tpu.matmul %30, %29, %cst_33 {dimension_numbers = #tpu.dot_dimension_numbers<[1], [0], [0], [1], [0, 0, 1, 1], [], []>} : vector<60x256xf32>, vector<256x256xf32>, vector<60x256xf32> -> vector<60x256xf32>
    %c0_34 = arith.constant 0 : index
    %c0_35 = arith.constant 0 : index
    %32 = vector.load %arg6[%c0_34, %c0_35] : memref<256x128xf32, #tpu.memory_space<vmem>>, vector<256x128xf32>
    %cst_36 = arith.constant dense<0.000000e+00> : vector<60x128xf32>
    %33 = tpu.matmul %31, %32, %cst_36 {dimension_numbers = #tpu.dot_dimension_numbers<[1], [0], [0], [1], [0, 0, 1, 1], [], []>} : vector<60x256xf32>, vector<256x128xf32>, vector<60x128xf32> -> vector<60x128xf32>
    %c0_37 = arith.constant 0 : index
    %c0_38 = arith.constant 0 : index
    %c0_39 = arith.constant 0 : index
    %c0_40 = arith.constant 0 : index
    %34 = vector.load %arg7[%c0_37, %c0_38, %c0_39, %c0_40] : memref<1x1x60x128xf32, #tpu.memory_space<vmem>>, vector<1x1x60x128xf32>
    %35 = vector.shape_cast %34 : vector<1x1x60x128xf32> to vector<60x128xf32>
    %36 = vector.shape_cast %33 : vector<60x128xf32> to vector<1x1x60x128xf32>
    tpu.vector_store %arg7[%c0_37, %c0_38, %c0_39, %c0_40], %36 {strides = array<i32>} : memref<1x1x60x128xf32, #tpu.memory_space<vmem>>, vector<1x1x60x128xf32>,
    return
  }
  func.func @transform_0(%arg0: i32) -> (i32, i32, i32, i32) {
    %c0_i32 = arith.constant 0 : i32
    %c0_i32_0 = arith.constant 0 : i32
    %c0_i32_1 = arith.constant 0 : i32
    %c0_i32_2 = arith.constant 0 : i32
    return %arg0, %c0_i32, %c0_i32_0, %c0_i32_1 : i32, i32, i32, i32
  }
  func.func @transform_1(%arg0: i32) -> (i32, i32, i32, i32) {
    %c0_i32 = arith.constant 0 : i32
    %c0_i32_0 = arith.constant 0 : i32
    %c0_i32_1 = arith.constant 0 : i32
    %c0_i32_2 = arith.constant 0 : i32
    return %arg0, %c0_i32, %c0_i32_0, %c0_i32_1 : i32, i32, i32, i32
  }
  func.func @transform_2(%arg0: i32) -> (i32, i32) {
    %c0_i32 = arith.constant 0 : i32
    %c0_i32_0 = arith.constant 0 : i32
    %c0_i32_1 = arith.constant 0 : i32
    return %c0_i32, %c0_i32_0 : i32, i32
  }
  func.func @transform_3(%arg0: i32) -> (i32, i32) {
    %c0_i32 = arith.constant 0 : i32
    %c0_i32_0 = arith.constant 0 : i32
    %c0_i32_1 = arith.constant 0 : i32
    return %c0_i32, %c0_i32_0 : i32, i32
  }
  func.func @transform_4(%arg0: i32) -> (i32, i32) {
    %c0_i32 = arith.constant 0 : i32
    %c0_i32_0 = arith.constant 0 : i32
    %c0_i32_1 = arith.constant 0 : i32
    return %c0_i32, %c0_i32_0 : i32, i32
  }
  func.func @transform_5(%arg0: i32) -> (i32, i32) {
    %c0_i32 = arith.constant 0 : i32
    %c0_i32_0 = arith.constant 0 : i32
    %c0_i32_1 = arith.constant 0 : i32
    return %c0_i32, %c0_i32_0 : i32, i32
  }
  func.func @transform_6(%arg0: i32) -> (i32, i32, i32, i32) {
    %c0_i32 = arith.constant 0 : i32
    %c0_i32_0 = arith.constant 0 : i32
    %c0_i32_1 = arith.constant 0 : i32
    %c0_i32_2 = arith.constant 0 : i32
    return %arg0, %c0_i32, %c0_i32_0, %c0_i32_1 : i32, i32, i32, i32
  }
}

</mosaic_0001>

<llo_original>
// kernel: _fused_eval_forward.1
$region0: #{_fused_eval_forward.1}
  #allocation0 [shape = 'u32[]', space=smem, size = 0x4, offset = 0x4, fixed_abs, tag = 'smem constant byte address 0x4 - core index']
  #allocation1 [shape = 'u32[144,128]{1,0:T(1,128)}', space=vmem, size = 0x12000, scoped, tag = 'internal scratch']
  %s0 = inlined_call_operand.vmem [shape: f32[2,3,60,90], index: 0, kind: input, shape index: {}]
  %s1 = inlined_call_operand.vmem [shape: f32[2,3,60,90], index: 1, kind: input, shape index: {}]
  %s2 = inlined_call_operand.vmem [shape: f32[256,60], index: 2, kind: input, shape index: {}]
  %s3 = inlined_call_operand.vmem [shape: f32[90,256], index: 3, kind: input, shape index: {}]
  %s4 = inlined_call_operand.vmem [shape: f32[60,256], index: 4, kind: input, shape index: {}]
  %s5 = inlined_call_operand.vmem [shape: f32[256,128], index: 5, kind: input, shape index: {}]
  %s6 = inlined_call_operand.vmem [shape: f32[2,1,60,128], index: 6, kind: output, shape index: {}]
  %s7 = sld [smem:[#allocation0]]
  $region57: #{_fused_eval_forward.1} parent=0
    _
  %s9 = ssub.s32 1, %s7
  %s10 = scalar_select 0, %s9, %s7
  loop: start=0, step=1, limit=4
  $region2: #{_fused_eval_forward.1} parent=0 // loop_pre_header
    _
  $region3: #{_fused_eval_forward.1} parent=0 // loop_header
    %s12 = sphi 0, %s16
    %p13 = scmp.ge.s32.totalorder %s12, 4
    %s22 = sphi 0, %s24
    %s25 = sphi 0, %s22
    %s26 = sphi 0, %s25
    %s42 = sphi 0, %s26
    %s48 = sphi 0, %s50
    %s51 = sphi 0, %s48
    %s52 = sphi 0, %s51
    %s68 = sphi 0, %s52
    %s72 = sphi 0, %s72
    %s74 = sphi 0, %s72
    %s75 = sphi 0, %s74
    %s89 = sphi 0, %s75
    %s93 = sphi 0, %s93
    %s95 = sphi 0, %s93
    %s96 = sphi 0, %s95
    %s110 = sphi 0, %s96
    %s114 = sphi 0, %s114
    %s116 = sphi 0, %s114
    %s117 = sphi 0, %s116
    %s131 = sphi 0, %s117
    %s135 = sphi 0, %s135
    %s137 = sphi 0, %s135
    %s138 = sphi 0, %s137
    %s152 = sphi 0, %s138
    %s158 = sphi 0, %s160
    %s161 = sphi 0, %s158
    %s162 = sphi 0, %s161
    %s178 = sphi 0, %s162
  $region4: #{_fused_eval_forward.1} parent=0 // loop_header_branch
    %15 = sbr.rel (%p13) target = $region8
  $region5: #{_fused_eval_forward.1} parent=0 // loop_body
    %s17 = ssub.s32 %s12, 1
    %s18 = ssub.s32 %s12, 2
    %s19 = sadd.s32 %s12, 1
    %s20 = ssub.s32 %s12, %s19
    %p21 = scmp.eq.s32.totalorder %s20, 0
    %s23 = sadd.s32 %s22, 1
    %s24 = scalar_select %p21, %s22, %s23
    %p27 = pneg %p21
    %p28 = scmp.eq.s32.totalorder %s12, 1
    %p29 = por %p27, %p28
    %p30 = scmp.ne.s32.totalorder %s22, %s25
    %p31 = scmp.eq.s32.totalorder %s12, 0
    %p32 = por %p30, %p31
    %p33 = scmp.ne.s32.totalorder %s22, %s25
    %p34 = scmp.eq.s32.totalorder %s17, 1
    %p35 = por %p33, %p34
    %p36 = scmp.ne.s32.totalorder %s25, %s26
    %p37 = scmp.eq.s32.totalorder %s17, 0
    %p38 = por %p36, %p37
    %p39 = scmp.ne.s32.totalorder %s25, %s26
    %p40 = scmp.eq.s32.totalorder %s18, 1
    %p41 = por %p39, %p40
    %p43 = scmp.ne.s32.totalorder %s26, %s42
    %p44 = scmp.eq.s32.totalorder %s18, 0
    %p45 = por %p43, %p44
    %s46 = ssub.s32 %s12, %s19
    %p47 = scmp.eq.s32.totalorder %s46, 0
    %s49 = sadd.s32 %s48, 1
    %s50 = scalar_select %p47, %s48, %s49
    %p53 = pneg %p47
    %p54 = scmp.eq.s32.totalorder %s12, 1
    %p55 = por %p53, %p54
    %p56 = scmp.ne.s32.totalorder %s48, %s51
    %p57 = scmp.eq.s32.totalorder %s12, 0
    %p58 = por %p56, %p57
    %p59 = scmp.ne.s32.totalorder %s48, %s51
    %p60 = scmp.eq.s32.totalorder %s17, 1
    %p61 = por %p59, %p60
    %p62 = scmp.ne.s32.totalorder %s51, %s52
    %p63 = scmp.eq.s32.totalorder %s17, 0
    %p64 = por %p62, %p63
    %p65 = scmp.ne.s32.totalorder %s51, %s52
    %p66 = scmp.eq.s32.totalorder %s18, 1
    %p67 = por %p65, %p66
    %p69 = scmp.ne.s32.totalorder %s52, %s68
    %p70 = scmp.eq.s32.totalorder %s18, 0
    %p71 = por %p69, %p70
    %s73 = sadd.s32 %s72, 1
    %p76 = scmp.eq.s32.totalorder %s12, 1
    %p77 = scmp.ne.s32.totalorder %s72, %s74
    %p78 = scmp.eq.s32.totalorder %s12, 0
    %p79 = por %p77, %p78
    %p80 = scmp.ne.s32.totalorder %s72, %s74
    %p81 = scmp.eq.s32.totalorder %s17, 1
    %p82 = por %p80, %p81
    %p83 = scmp.ne.s32.totalorder %s74, %s75
    %p84 = scmp.eq.s32.totalorder %s17, 0
    %p85 = por %p83, %p84
    %p86 = scmp.ne.s32.totalorder %s74, %s75
    %p87 = scmp.eq.s32.totalorder %s18, 1
    %p88 = por %p86, %p87
    %p90 = scmp.ne.s32.totalorder %s75, %s89
    %p91 = scmp.eq.s32.totalorder %s18, 0
    %p92 = por %p90, %p91
    %s94 = sadd.s32 %s93, 1
    %p97 = scmp.eq.s32.totalorder %s12, 1
    %p98 = scmp.ne.s32.totalorder %s93, %s95
    %p99 = scmp.eq.s32.totalorder %s12, 0
    %p100 = por %p98, %p99
    %p101 = scmp.ne.s32.totalorder %s93, %s95
    %p102 = scmp.eq.s32.totalorder %s17, 1
    %p103 = por %p101, %p102
    %p104 = scmp.ne.s32.totalorder %s95, %s96
    %p105 = scmp.eq.s32.totalorder %s17, 0
    %p106 = por %p104, %p105
    %p107 = scmp.ne.s32.totalorder %s95, %s96
    %p108 = scmp.eq.s32.totalorder %s18, 1
    %p109 = por %p107, %p108
    %p111 = scmp.ne.s32.totalorder %s96, %s110
    %p112 = scmp.eq.s32.totalorder %s18, 0
    %p113 = por %p111, %p112
    %s115 = sadd.s32 %s114, 1
    %p118 = scmp.eq.s32.totalorder %s12, 1
    %p119 = scmp.ne.s32.totalorder %s114, %s116
    %p120 = scmp.eq.s32.totalorder %s12, 0
    %p121 = por %p119, %p120
    %p122 = scmp.ne.s32.totalorder %s114, %s116
    %p123 = scmp.eq.s32.totalorder %s17, 1
    %p124 = por %p122, %p123
    %p125 = scmp.ne.s32.totalorder %s116, %s117
    %p126 = scmp.eq.s32.totalorder %s17, 0
    %p127 = por %p125, %p126
    %p128 = scmp.ne.s32.totalorder %s116, %s117
    %p129 = scmp.eq.s32.totalorder %s18, 1
    %p130 = por %p128, %p129
    %p132 = scmp.ne.s32.totalorder %s117, %s131
    %p133 = scmp.eq.s32.totalorder %s18, 0
    %p134 = por %p132, %p133
    %s136 = sadd.s32 %s135, 1
    %p139 = scmp.eq.s32.totalorder %s12, 1
    %p140 = scmp.ne.s32.totalorder %s135, %s137
    %p141 = scmp.eq.s32.totalorder %s12, 0
    %p142 = por %p140, %p141
    %p143 = scmp.ne.s32.totalorder %s135, %s137
    %p144 = scmp.eq.s32.totalorder %s17, 1
    %p145 = por %p143, %p144
    %p146 = scmp.ne.s32.totalorder %s137, %s138
    %p147 = scmp.eq.s32.totalorder %s17, 0
    %p148 = por %p146, %p147
    %p149 = scmp.ne.s32.totalorder %s137, %s138
    %p150 = scmp.eq.s32.totalorder %s18, 1
    %p151 = por %p149, %p150
    %p153 = scmp.ne.s32.totalorder %s138, %s152
    %p154 = scmp.eq.s32.totalorder %s18, 0
    %p155 = por %p153, %p154
    %s156 = ssub.s32 %s12, %s19
    %p157 = scmp.eq.s32.totalorder %s156, 0
    %s159 = sadd.s32 %s158, 1
    %s160 = scalar_select %p157, %s158, %s159
    %p163 = pneg %p157
    %p164 = scmp.eq.s32.totalorder %s12, 1
    %p165 = por %p163, %p164
    %p166 = scmp.ne.s32.totalorder %s158, %s161
    %p167 = scmp.eq.s32.totalorder %s12, 0
    %p168 = por %p166, %p167
    %p169 = scmp.ne.s32.totalorder %s158, %s161
    %p170 = scmp.eq.s32.totalorder %s17, 1
    %p171 = por %p169, %p170
    %p172 = scmp.ne.s32.totalorder %s161, %s162
    %p173 = scmp.eq.s32.totalorder %s17, 0
    %p174 = por %p172, %p173
    %p175 = scmp.ne.s32.totalorder %s161, %s162
    %p176 = scmp.eq.s32.totalorder %s18, 1
    %p177 = por %p175, %p176
    %p179 = scmp.ne.s32.totalorder %s162, %s178
    %p180 = scmp.eq.s32.totalorder %s18, 0
    %p181 = por %p179, %p180
    %p182 = scmp.le.s32.totalorder 1, %s12
    %p183 = scmp.lt.s32.totalorder %s12, 3
    %p184 = pnand %p182, %p183
    %p185 = pneg %p184
    // Predicated region
    $region9: #{_fused_eval_forward.1} parent=5 // pred_check
      _
    $region10: #{_fused_eval_forward.1} parent=5 // pred_check_branch
      %187 = sbr.rel (%p184) target = $region12
    $region11: #{_fused_eval_forward.1} parent=5 // pred_region
      %s188 = ssub.s32 %s12, 1
      // Predicated region
      $region13: #{_fused_eval_forward.1} parent=11 // pred_check
        %p189 = pneg %p85
      $region14: #{_fused_eval_forward.1} parent=11 // pred_check_branch
        %191 = sbr.rel (%p189) target = $region16
      $region15: #{_fused_eval_forward.1} parent=11 // pred_region
        _
      $region16: #{_fused_eval_forward.1} parent=11 // pred_fallthru
        _
      // Predicated region
      $region17: #{_fused_eval_forward.1} parent=11 // pred_check
        %p192 = pneg %p106
      $region18: #{_fused_eval_forward.1} parent=11 // pred_check_branch
        %194 = sbr.rel (%p192) target = $region20
      $region19: #{_fused_eval_forward.1} parent=11 // pred_region
        _
      $region20: #{_fused_eval_forward.1} parent=11 // pred_fallthru
        _
      // Predicated region
      $region21: #{_fused_eval_forward.1} parent=11 // pred_check
        %p195 = pneg %p127
      $region22: #{_fused_eval_forward.1} parent=11 // pred_check_branch
        %197 = sbr.rel (%p195) target = $region24
      $region23: #{_fused_eval_forward.1} parent=11 // pred_region
        _
      $region24: #{_fused_eval_forward.1} parent=11 // pred_fallthru
        _
      // Predicated region
      $region25: #{_fused_eval_forward.1} parent=11 // pred_check
        %p198 = pneg %p148
      $region26: #{_fused_eval_forward.1} parent=11 // pred_check_branch
        %200 = sbr.rel (%p198) target = $region28
      $region27: #{_fused_eval_forward.1} parent=11 // pred_region
        _
      $region28: #{_fused_eval_forward.1} parent=11 // pred_fallthru
        _
    $region12: #{_fused_eval_forward.1} parent=5 // pred_fallthru
      _
    %p201 = scmp.lt.s32.totalorder %s12, 2
    // Predicated region
    $region29: #{_fused_eval_forward.1} parent=5 // pred_check
      %p202 = pneg %p201
    $region30: #{_fused_eval_forward.1} parent=5 // pred_check_branch
      %204 = sbr.rel (%p202) target = $region32
    $region31: #{_fused_eval_forward.1} parent=5 // pred_region
      // Predicated region
      $region33: #{_fused_eval_forward.1} parent=31 // pred_check
        %p205 = pneg %p32
      $region34: #{_fused_eval_forward.1} parent=31 // pred_check_branch
        %207 = sbr.rel (%p205) target = $region36
      $region35: #{_fused_eval_forward.1} parent=31 // pred_region
        %p208 = scmp.lt.s32.totalorder %s12, 1
        %s209 = scalar_select %p208, %s12, 1
        %s210 = smul.addr %s209, 24
        %s211 = smul.addr %s210, 8
        %s212 = scalar_lea.vmem %s0, %s211
      $region36: #{_fused_eval_forward.1} parent=31 // pred_fallthru
        _
      // Predicated region
      $region37: #{_fused_eval_forward.1} parent=31 // pred_check
        %p213 = pneg %p58
      $region38: #{_fused_eval_forward.1} parent=31 // pred_check_branch
        %215 = sbr.rel (%p213) target = $region40
      $region39: #{_fused_eval_forward.1} parent=31 // pred_region
        %p216 = scmp.lt.s32.totalorder %s12, 1
        %s217 = scalar_select %p216, %s12, 1
        %s218 = smul.addr %s217, 24
        %s219 = smul.addr %s218, 8
        %s220 = scalar_lea.vmem %s1, %s219
      $region40: #{_fused_eval_forward.1} parent=31 // pred_fallthru
        _
    $region32: #{_fused_eval_forward.1} parent=5 // pred_fallthru
      _
    %p221 = scmp.le.s32.totalorder 1, %s12
    %p222 = scmp.lt.s32.totalorder %s12, 3
    %p223 = pnand %p221, %p222
    %p224 = pneg %p223
    // Predicated region
    $region41: #{_fused_eval_forward.1} parent=5 // pred_check
      _
    $region42: #{_fused_eval_forward.1} parent=5 // pred_check_branch
      %226 = sbr.rel (%p223) target = $region44
    $region43: #{_fused_eval_forward.1} parent=5 // pred_region
      %s227 = ssub.s32 %s12, 1
      %p228 = scmp.lt.s32.totalorder %s17, 1
      %s229 = scalar_select %p228, %s17, 1
      %s230 = smul.addr %s229, 24
      %s231 = smul.addr %s230, 8
      %s232 = scalar_lea.vmem %s0, %s231
      %p233 = pneg %p38
      %p234 = pneg %p35
      %p235 = scmp.lt.s32.totalorder %s17, 1
      %s236 = scalar_select %p235, %s17, 1
      %s237 = smul.addr %s236, 24
      %s238 = smul.addr %s237, 8
      %s239 = scalar_lea.vmem %s1, %s238
      %p240 = pneg %p64
      %p241 = pneg %p61
      %p242 = pneg %p85
      %p243 = pneg %p82
      %p244 = pneg %p106
      %p245 = pneg %p103
      %p246 = pneg %p127
      %p247 = pneg %p124
      %p248 = pneg %p148
      %p249 = pneg %p145
      %p250 = pneg %p174
      %p251 = pneg %p171
      %p252 = scmp.lt.s32.totalorder %s17, 1
      %s253 = scalar_select %p252, %s17, 1
      %s254 = smul.addr %s253, 8
      %s255 = smul.addr %s254, 8
      %s256 = scalar_lea.vmem %s6, %s255
      %p257 = scmp.lt.s32.totalorder %s17, 1
      %s258 = scalar_select %p257, %s17, 1
      %s259 = smul.addr %s258, 24
      %s260 = smul.addr %s259, 8
      %s261 = scalar_lea.vmem %s0, %s260
      %p262 = scmp.lt.s32.totalorder %s17, 1
      %s263 = scalar_select %p262, %s17, 1
      %s264 = smul.addr %s263, 24
      %s265 = smul.addr %s264, 8
      %s266 = scalar_lea.vmem %s1, %s265
      %p267 = scmp.lt.s32.totalorder %s17, 1
      %s268 = scalar_select %p267, %s17, 1
      %s269 = smul.addr %s268, 8
      %s270 = smul.addr %s269, 8
      %s271 = scalar_lea.vmem %s6, %s270
      %v272 = vld [vmem:[%s2] sm:$0xff]
      %v273 = vld [vmem:[%s2 + $0x8] sm:$0xff]
      %v274 = vld [vmem:[%s2 + $0x10] sm:$0xff]
      %v275 = vld [vmem:[%s2 + $0x18] sm:$0xff]
      %v276 = vld [vmem:[%s2 + $0x20] sm:$0xff]
      %v277 = vld [vmem:[%s2 + $0x28] sm:$0xff]
      %v278 = vld [vmem:[%s2 + $0x30] sm:$0xff]
      %v279 = vld [vmem:[%s2 + $0x38] sm:$0xff]
      %v280 = vld [vmem:[%s2 + $0x40] sm:$0xff]
      %v281 = vld [vmem:[%s2 + $0x48] sm:$0xff]
      %v282 = vld [vmem:[%s2 + $0x50] sm:$0xff]
      %v283 = vld [vmem:[%s2 + $0x58] sm:$0xff]
      %v284 = vld [vmem:[%s2 + $0x60] sm:$0xff]
      %v285 = vld [vmem:[%s2 + $0x68] sm:$0xff]
      %v286 = vld [vmem:[%s2 + $0x70] sm:$0xff]
      %v287 = vld [vmem:[%s2 + $0x78] sm:$0xff]
      %v288 = vld [vmem:[%s2 + $0x80] sm:$0xff]
      %v289 = vld [vmem:[%s2 + $0x88] sm:$0xff]
      %v290 = vld [vmem:[%s2 + $0x90] sm:$0xff]
      %v291 = vld [vmem:[%s2 + $0x98] sm:$0xff]
      %v292 = vld [vmem:[%s2 + $0xa0] sm:$0xff]
      %v293 = vld [vmem:[%s2 + $0xa8] sm:$0xff]
      %v294 = vld [vmem:[%s2 + $0xb0] sm:$0xff]
      %v295 = vld [vmem:[%s2 + $0xb8] sm:$0xff]
      %v296 = vld [vmem:[%s2 + $0xc0] sm:$0xff]
      %v297 = vld [vmem:[%s2 + $0xc8] sm:$0xff]
      %v298 = vld [vmem:[%s2 + $0xd0] sm:$0xff]
      %v299 = vld [vmem:[%s2 + $0xd8] sm:$0xff]
      %v300 = vld [vmem:[%s2 + $0xe0] sm:$0xff]
      %v301 = vld [vmem:[%s2 + $0xe8] sm:$0xff]
      %v302 = vld [vmem:[%s2 + $0xf0] sm:$0xff]
      %v303 = vld [vmem:[%s2 + $0xf8] sm:$0xff]
      %v304 = vld [vmem:[%s3] sm:$0xff]
      %v305 = vld [vmem:[%s3 + $0x8] sm:$0xff]
      %v306 = vld [vmem:[%s3 + $0x10] sm:$0xff]
      %v307 = vld [vmem:[%s3 + $0x18] sm:$0xff]
      %v308 = vld [vmem:[%s3 + $0x20] sm:$0xff]
      %v309 = vld [vmem:[%s3 + $0x28] sm:$0xff]
      %v310 = vld [vmem:[%s3 + $0x30] sm:$0xff]
      %v311 = vld [vmem:[%s3 + $0x38] sm:$0xff]
      %v312 = vld [vmem:[%s3 + $0x40] sm:$0xff]
      %v313 = vld [vmem:[%s3 + $0x48] sm:$0xff]
      %v314 = vld [vmem:[%s3 + $0x50] sm:$0xff]
      %v315 = vld [vmem:[%s3 + $0x58] sm:$0xff]
      %v316 = vld [vmem:[%s3 + $0x60] sm:$0xff]
      %v317 = vld [vmem:[%s3 + $0x68] sm:$0xff]
      %v318 = vld [vmem:[%s3 + $0x70] sm:$0xff]
      %v319 = vld [vmem:[%s3 + $0x78] sm:$0xff]
      %v320 = vld [vmem:[%s3 + $0x80] sm:$0xff]
      %v321 = vld [vmem:[%s3 + $0x88] sm:$0xff]
      %v322 = vld [vmem:[%s3 + $0x90] sm:$0xff]
      %v323 = vld [vmem:[%s3 + $0x98] sm:$0xff]
      %v324 = vld [vmem:[%s3 + $0xa0] sm:$0xff]
      %v325 = vld [vmem:[%s3 + $0xa8] sm:$0xff]
      %v326 = vld [vmem:[%s3 + $0xb0] sm:$0x3]
      %v327 = vld [vmem:[%s3 + $0xb8] sm:$0x3]
      %v328 = vld [vmem:[%s261] sm:$0xff]
      %v329 = vld [vmem:[%s261 + $0x8] sm:$0xff]
      %v330 = vld [vmem:[%s261 + $0x10] sm:$0xff]
      %v331 = vld [vmem:[%s261 + $0x18] sm:$0xff]
      %v332 = vld [vmem:[%s261 + $0x20] sm:$0xff]
      %v333 = vld [vmem:[%s261 + $0x28] sm:$0xff]
      %v334 = vld [vmem:[%s261 + $0x30] sm:$0xff]
      %v335 = vld [vmem:[%s261 + $0x38] sm:$0xf]
      %v336 = vld [vmem:[%s266] sm:$0xff]
      %v337 = vld [vmem:[%s266 + $0x8] sm:$0xff]
      %v338 = vld [vmem:[%s266 + $0x10] sm:$0xff]
      %v339 = vld [vmem:[%s266 + $0x18] sm:$0xff]
      %v340 = vld [vmem:[%s266 + $0x20] sm:$0xff]
      %v341 = vld [vmem:[%s266 + $0x28] sm:$0xff]
      %v342 = vld [vmem:[%s266 + $0x30] sm:$0xff]
      %v343 = vld [vmem:[%s266 + $0x38] sm:$0xf]
      %v344 = vsub.f32 %v328, %v336
      %v345 = vsub.f32 %v329, %v337
      %v346 = vsub.f32 %v330, %v338
      %v347 = vsub.f32 %v331, %v339
      %v348 = vsub.f32 %v332, %v340
      %v349 = vsub.f32 %v333, %v341
      %v350 = vsub.f32 %v334, %v342
      %v351 = vsub.f32 %v335, %v343
      %vm352 = vcmask 490496
      %v354 = vsel %vm352, %v272, 0
      %v357 = vsel %vm352, %v273, 0
      %v360 = vsel %vm352, %v274, 0
      %v363 = vsel %vm352, %v275, 0
      %v366 = vsel %vm352, %v276, 0
      %v369 = vsel %vm352, %v277, 0
      %v372 = vsel %vm352, %v278, 0
      %v375 = vsel %vm352, %v279, 0
      %v378 = vsel %vm352, %v280, 0
      %v381 = vsel %vm352, %v281, 0
      %v384 = vsel %vm352, %v282, 0
      %v387 = vsel %vm352, %v283, 0
      %v390 = vsel %vm352, %v284, 0
      %v393 = vsel %vm352, %v285, 0
      %v396 = vsel %vm352, %v286, 0
      %v399 = vsel %vm352, %v287, 0
      %v402 = vsel %vm352, %v288, 0
      %v405 = vsel %vm352, %v289, 0
      %v408 = vsel %vm352, %v290, 0
      %v411 = vsel %vm352, %v291, 0
      %v414 = vsel %vm352, %v292, 0
      %v417 = vsel %vm352, %v293, 0
      %v420 = vsel %vm352, %v294, 0
      %v423 = vsel %vm352, %v295, 0
      %v426 = vsel %vm352, %v296, 0
      %v429 = vsel %vm352, %v297, 0
      %v432 = vsel %vm352, %v298, 0
      %v435 = vsel %vm352, %v299, 0
      %v438 = vsel %vm352, %v300, 0
      %v441 = vsel %vm352, %v301, 0
      %v444 = vsel %vm352, %v302, 0
      %v447 = vsel %vm352, %v303, 0
      %vm449 = vcmask 1043456
      %v451 = vsel %vm449, %v351, 0
      %453 = vmatprep.subr.mxu0 0.0
      %454 = vmatpush1.msra.mxu0 %v344
      %455 = vmatprep.subr.mxu0 0.0
      %456 = vmatpush1.msra.mxu0 %v345
      %457 = vmatprep.subr.mxu0 0.0
      %458 = vmatpush1.msra.mxu0 %v346
      %459 = vmatprep.subr.mxu0 0.0
      %460 = vmatpush1.msra.mxu0 %v347
      %461 = vmatprep.subr.mxu0 0.0
      %462 = vmatpush1.msra.mxu0 %v348
      %463 = vmatprep.subr.mxu0 0.0
      %464 = vmatpush1.msra.mxu0 %v349
      %465 = vmatprep.subr.mxu0 0.0
      %466 = vmatpush1.msra.mxu0 %v350
      %467 = vmatprep.subr.mxu0 0.0
      %468 = vmatpush1.msra.mxu0 %v451
      %469 = vmatprep.subr.mxu0 0.0
      %470 = vmatpush1.msra.mxu0 0.0
      %471 = vmatprep.subr.mxu0 0.0
      %472 = vmatpush1.msra.mxu0 0.0
      %473 = vmatprep.subr.mxu0 0.0
      %474 = vmatpush1.msra.mxu0 0.0
      %475 = vmatprep.subr.mxu0 0.0
      %476 = vmatpush1.msra.mxu0 0.0
      %477 = vmatprep.subr.mxu0 0.0
      %478 = vmatpush1.msra.mxu0 0.0
      %479 = vmatprep.subr.mxu0 0.0
      %480 = vmatpush1.msra.mxu0 0.0
      %481 = vmatprep.subr.mxu0 0.0
      %482 = vmatpush1.msra.mxu0 0.0
      %483 = vmatprep.subr.mxu0 0.0
      %484 = vmatpush1.msra.mxu0 0.0
      %485 = vmatprep.subr.mxu0 0.0
      %486 = vmatpush1.msra.mxu0 0.0
      %487 = vmatprep.subr.mxu0 0.0
      %488 = vmatpush1.msra.mxu0 0.0
      %489 = vmatprep.subr.mxu0 0.0
      %490 = vmatpush1.msra.mxu0 0.0
      %491 = vmatprep.subr.mxu0 0.0
      %492 = vmatpush1.msra.mxu0 0.0
      %493 = vmatprep.subr.mxu0 0.0
      %494 = vmatpush1.msra.mxu0 0.0
      %495 = vmatprep.subr.mxu0 0.0
      %496 = vmatpush1.msra.mxu0 0.0
      %497 = vmatprep.subr.mxu0 0.0
      %498 = vmatpush1.msra.mxu0 0.0
      %499 = vmatprep.subr.mxu0 0.0
      %500 = vmatpush1.msra.mxu0 0.0
      %501 = vmatprep.subr.mxu0 0.0
      %502 = vmatpush1.msra.mxu0 0.0
      %503 = vmatprep.subr.mxu0 0.0
      %504 = vmatpush1.msra.mxu0 0.0
      %505 = vmatprep.subr.mxu0 0.0
      %506 = vmatpush1.msra.mxu0 0.0
      %507 = vmatprep.subr.mxu0 0.0
      %508 = vmatpush1.msra.mxu0 0.0
      %509 = vmatprep.subr.mxu0 0.0
      %510 = vmatpush1.msra.mxu0 0.0
      %511 = vmatprep.subr.mxu0 0.0
      %512 = vmatpush1.msra.mxu0 0.0
      %513 = vmatprep.subr.mxu0 0.0
      %514 = vmatpush1.msra.mxu0 0.0
      %515 = vmatprep.subr.mxu0 0.0
      %516 = vmatpush1.msra.mxu0 0.0
      %517 = vmatprep.mubr.f32.mxu0 0.0
      %518 = vmatmul.mubr.f32.gmra.mrb[0].mxu0 %v354
      %v519 = vpop.f32.mrb[0].mxu0
      %v520 = vadd.f32 0.0, %v519
      %v521 = vpop.f32.mrb[0].mxu0
      %522 = vmatprep.mubr.f32.mxu0 0.0
      %523 = vmatmul.mubr.f32.gmra.mrb[0].mxu0 %v357
      %v524 = vpop.f32.mrb[0].mxu0
      %v525 = vadd.f32 0.0, %v524
      %v526 = vpop.f32.mrb[0].mxu0
      %527 = vmatprep.mubr.f32.mxu0 0.0
      %528 = vmatmul.mubr.f32.gmra.mrb[0].mxu0 %v360
      %v529 = vpop.f32.mrb[0].mxu0
      %v530 = vadd.f32 0.0, %v529
      %v531 = vpop.f32.mrb[0].mxu0
      %532 = vmatprep.mubr.f32.mxu0 0.0
      %533 = vmatmul.mubr.f32.gmra.mrb[0].mxu0 %v363
      %v534 = vpop.f32.mrb[0].mxu0
      %v535 = vadd.f32 0.0, %v534
      %v536 = vpop.f32.mrb[0].mxu0
      %537 = vmatprep.mubr.f32.mxu0 0.0
      %538 = vmatmul.mubr.f32.gmra.mrb[0].mxu0 %v366
      %v539 = vpop.f32.mrb[0].mxu0
      %v540 = vadd.f32 0.0, %v539
      %v541 = vpop.f32.mrb[0].mxu0
      %542 = vmatprep.mubr.f32.mxu0 0.0
      %543 = vmatmul.mubr.f32.gmra.mrb[0].mxu0 %v369
      %v544 = vpop.f32.mrb[0].mxu0
      %v545 = vadd.f32 0.0, %v544
      %v546 = vpop.f32.mrb[0].mxu0
      %547 = vmatprep.mubr.f32.mxu0 0.0
      %548 = vmatmul.mubr.f32.gmra.mrb[0].mxu0 %v372
      %v549 = vpop.f32.mrb[0].mxu0
      %v550 = vadd.f32 0.0, %v549
      %v551 = vpop.f32.mrb[0].mxu0
      %552 = vmatprep.mubr.f32.mxu0 0.0
      %553 = vmatmul.mubr.f32.gmra.mrb[0].mxu0 %v375
      %v554 = vpop.f32.mrb[0].mxu0
      %v555 = vadd.f32 0.0, %v554
      %v556 = vpop.f32.mrb[0].mxu0
      %557 = vmatprep.mubr.f32.mxu0 0.0
      %558 = vmatmul.mubr.f32.gmra.mrb[0].mxu0 %v378
      %v559 = vpop.f32.mrb[0].mxu0
      %v560 = vadd.f32 0.0, %v559
      %v561 = vpop.f32.mrb[0].mxu0
      %562 = vmatprep.mubr.f32.mxu0 0.0
      %563 = vmatmul.mubr.f32.gmra.mrb[0].mxu0 %v381
      %v564 = vpop.f32.mrb[0].mxu0
      %v565 = vadd.f32 0.0, %v564
      %v566 = vpop.f32.mrb[0].mxu0
      %567 = vmatprep.mubr.f32.mxu0 0.0
      %568 = vmatmul.mubr.f32.gmra.mrb[0].mxu0 %v384
      %v569 = vpop.f32.mrb[0].mxu0
      %v570 = vadd.f32 0.0, %v569
      %v571 = vpop.f32.mrb[0].mxu0
      %572 = vmatprep.mubr.f32.mxu0 0.0
      %573 = vmatmul.mubr.f32.gmra.mrb[0].mxu0 %v387
      %v574 = vpop.f32.mrb[0].mxu0
      %v575 = vadd.f32 0.0, %v574
      %v576 = vpop.f32.mrb[0].mxu0
      %577 = vmatprep.mubr.f32.mxu0 0.0
      %578 = vmatmul.mubr.f32.gmra.mrb[0].mxu0 %v390
      %v579 = vpop.f32.mrb[0].mxu0
      %v580 = vadd.f32 0.0, %v579
      %v581 = vpop.f32.mrb[0].mxu0
      %582 = vmatprep.mubr.f32.mxu0 0.0
      %583 = vmatmul.mubr.f32.gmra.mrb[0].mxu0 %v393
      %v584 = vpop.f32.mrb[0].mxu0
      %v585 = vadd.f32 0.0, %v584
      %v586 = vpop.f32.mrb[0].mxu0
      %587 = vmatprep.mubr.f32.mxu0 0.0
      %588 = vmatmul.mubr.f32.gmra.mrb[0].mxu0 %v396
      %v589 = vpop.f32.mrb[0].mxu0
      %v590 = vadd.f32 0.0, %v589
      %v591 = vpop.f32.mrb[0].mxu0
      %592 = vmatprep.mubr.f32.mxu0 0.0
      %593 = vmatmul.mubr.f32.gmra.mrb[0].mxu0 %v399
      %v594 = vpop.f32.mrb[0].mxu0
      %v595 = vadd.f32 0.0, %v594
      %v596 = vpop.f32.mrb[0].mxu0
      %597 = vmatprep.mubr.f32.mxu0 0.0
      %598 = vmatmul.mubr.f32.gmra.mrb[0].mxu0 %v402
      %v599 = vpop.f32.mrb[0].mxu0
      %v600 = vadd.f32 0.0, %v599
      %v601 = vpop.f32.mrb[0].mxu0
      %602 = vmatprep.mubr.f32.mxu0 0.0
      %603 = vmatmul.mubr.f32.gmra.mrb[0].mxu0 %v405
      %v604 = vpop.f32.mrb[0].mxu0
      %v605 = vadd.f32 0.0, %v604
      %v606 = vpop.f32.mrb[0].mxu0
      %607 = vmatprep.mubr.f32.mxu0 0.0
      %608 = vmatmul.mubr.f32.gmra.mrb[0].mxu0 %v408
      %v609 = vpop.f32.mrb[0].mxu0
      %v610 = vadd.f32 0.0, %v609
      %v611 = vpop.f32.mrb[0].mxu0
      %612 = vmatprep.mubr.f32.mxu0 0.0
      %613 = vmatmul.mubr.f32.gmra.mrb[0].mxu0 %v411
      %v614 = vpop.f32.mrb[0].mxu0
      %v615 = vadd.f32 0.0, %v614
      %v616 = vpop.f32.mrb[0].mxu0
      %617 = vmatprep.mubr.f32.mxu0 0.0
      %618 = vmatmul.mubr.f32.gmra.mrb[0].mxu0 %v414
      %v619 = vpop.f32.mrb[0].mxu0
      %v620 = vadd.f32 0.0, %v619
      %v621 = vpop.f32.mrb[0].mxu0
      %622 = vmatprep.mubr.f32.mxu0 0.0
      %623 = vmatmul.mubr.f32.gmra.mrb[0].mxu0 %v417
      %v624 = vpop.f32.mrb[0].mxu0
      %v625 = vadd.f32 0.0, %v624
      %v626 = vpop.f32.mrb[0].mxu0
      %627 = vmatprep.mubr.f32.mxu0 0.0
      %628 = vmatmul.mubr.f32.gmra.mrb[0].mxu0 %v420
      %v629 = vpop.f32.mrb[0].mxu0
      %v630 = vadd.f32 0.0, %v629
      %v631 = vpop.f32.mrb[0].mxu0
      %632 = vmatprep.mubr.f32.mxu0 0.0
      %633 = vmatmul.mubr.f32.gmra.mrb[0].mxu0 %v423
      %v634 = vpop.f32.mrb[0].mxu0
      %v635 = vadd.f32 0.0, %v634
      %v636 = vpop.f32.mrb[0].mxu0
      %637 = vmatprep.mubr.f32.mxu0 0.0
      %638 = vmatmul.mubr.f32.gmra.mrb[0].mxu0 %v426
      %v639 = vpop.f32.mrb[0].mxu0
      %v640 = vadd.f32 0.0, %v639
      %v641 = vpop.f32.mrb[0].mxu0
      %642 = vmatprep.mubr.f32.mxu0 0.0
      %643 = vmatmul.mubr.f32.gmra.mrb[0].mxu0 %v429
      %v644 = vpop.f32.mrb[0].mxu0
      %v645 = vadd.f32 0.0, %v644
      %v646 = vpop.f32.mrb[0].mxu0
      %647 = vmatprep.mubr.f32.mxu0 0.0
      %648 = vmatmul.mubr.f32.gmra.mrb[0].mxu0 %v432
      %v649 = vpop.f32.mrb[0].mxu0
      %v650 = vadd.f32 0.0, %v649
      %v651 = vpop.f32.mrb[0].mxu0
      %652 = vmatprep.mubr.f32.mxu0 0.0
      %653 = vmatmul.mubr.f32.gmra.mrb[0].mxu0 %v435
      %v654 = vpop.f32.mrb[0].mxu0
      %v655 = vadd.f32 0.0, %v654
      %v656 = vpop.f32.mrb[0].mxu0
      %657 = vmatprep.mubr.f32.mxu0 0.0
      %658 = vmatmul.mubr.f32.gmra.mrb[0].mxu0 %v438
      %v659 = vpop.f32.mrb[0].mxu0
      %v660 = vadd.f32 0.0, %v659
      %v661 = vpop.f32.mrb[0].mxu0
      %662 = vmatprep.mubr.f32.mxu0 0.0
      %663 = vmatmul.mubr.f32.gmra.mrb[0].mxu0 %v441
      %v664 = vpop.f32.mrb[0].mxu0
      %v665 = vadd.f32 0.0, %v664
      %v666 = vpop.f32.mrb[0].mxu0
      %667 = vmatprep.mubr.f32.mxu0 0.0
      %668 = vmatmul.mubr.f32.gmra.mrb[0].mxu0 %v444
      %v669 = vpop.f32.mrb[0].mxu0
      %v670 = vadd.f32 0.0, %v669
      %v671 = vpop.f32.mrb[0].mxu0
      %672 = vmatprep.mubr.f32.mxu0 0.0
      %673 = vmatmul.mubr.f32.gmra.mrb[0].mxu0 %v447
      %v674 = vpop.f32.mrb[0].mxu0
      %v675 = vadd.f32 0.0, %v674
      %v676 = vpop.f32.mrb[0].mxu0
      %677 = vdwg.mxu0
      %vm678 = vcmask 736256
      %v680 = vsel %vm678, %v520, 0
      %v683 = vsel %vm678, %v525, 0
      %v686 = vsel %vm678, %v530, 0
      %v689 = vsel %vm678, %v535, 0
      %v692 = vsel %vm678, %v540, 0
      %v695 = vsel %vm678, %v545, 0
      %v698 = vsel %vm678, %v550, 0
      %v701 = vsel %vm678, %v555, 0
      %v704 = vsel %vm678, %v560, 0
      %v707 = vsel %vm678, %v565, 0
      %v710 = vsel %vm678, %v570, 0
      %v713 = vsel %vm678, %v575, 0
      %v716 = vsel %vm678, %v580, 0
      %v719 = vsel %vm678, %v585, 0
      %v722 = vsel %vm678, %v590, 0
      %v725 = vsel %vm678, %v595, 0
      %v728 = vsel %vm678, %v600, 0
      %v731 = vsel %vm678, %v605, 0
      %v734 = vsel %vm678, %v610, 0
      %v737 = vsel %vm678, %v615, 0
      %v740 = vsel %vm678, %v620, 0
      %v743 = vsel %vm678, %v625, 0
      %v746 = vsel %vm678, %v630, 0
      %v749 = vsel %vm678, %v635, 0
      %v752 = vsel %vm678, %v640, 0
      %v755 = vsel %vm678, %v645, 0
      %v758 = vsel %vm678, %v650, 0
      %v761 = vsel %vm678, %v655, 0
      %v764 = vsel %vm678, %v660, 0
      %v767 = vsel %vm678, %v665, 0
      %v770 = vsel %vm678, %v670, 0
      %v773 = vsel %vm678, %v675, 0
      %vm775 = vcmask 1041408
      %v777 = vsel %vm775, %v326, 0
      %v780 = vsel %vm775, %v327, 0
      %782 = vmatprep.subr.mxu0 %v305
      %783 = vmatpush1.msra.mxu0 %v304
      %784 = vmatprep.subr.mxu0 %v307
      %785 = vmatpush1.msra.mxu0 %v306
      %786 = vmatprep.subr.mxu0 %v309
      %787 = vmatpush1.msra.mxu0 %v308
      %788 = vmatprep.subr.mxu0 %v311
      %789 = vmatpush1.msra.mxu0 %v310
      %790 = vmatprep.subr.mxu0 %v313
      %791 = vmatpush1.msra.mxu0 %v312
      %792 = vmatprep.subr.mxu0 %v315
      %793 = vmatpush1.msra.mxu0 %v314
      %794 = vmatprep.subr.mxu0 %v317
      %795 = vmatpush1.msra.mxu0 %v316
      %796 = vmatprep.subr.mxu0 %v319
      %797 = vmatpush1.msra.mxu0 %v318
      %798 = vmatprep.subr.mxu0 %v321
      %799 = vmatpush1.msra.mxu0 %v320
      %800 = vmatprep.subr.mxu0 %v323
      %801 = vmatpush1.msra.mxu0 %v322
      %802 = vmatprep.subr.mxu0 %v325
      %803 = vmatpush1.msra.mxu0 %v324
      %804 = vmatprep.subr.mxu0 %v780
      %805 = vmatpush1.msra.mxu0 %v777
      %806 = vmatprep.subr.mxu0 0.0
      %807 = vmatpush1.msra.mxu0 0.0
      %808 = vmatprep.subr.mxu0 0.0
      %809 = vmatpush1.msra.mxu0 0.0
      %810 = vmatprep.subr.mxu0 0.0
      %811 = vmatpush1.msra.mxu0 0.0
      %812 = vmatprep.subr.mxu0 0.0
      %813 = vmatpush1.msra.mxu0 0.0
      %814 = vmatprep.subr.mxu0 0.0
      %815 = vmatpush1.msra.mxu0 0.0
      %816 = vmatprep.subr.mxu0 0.0
      %817 = vmatpush1.msra.mxu0 0.0
      %818 = vmatprep.subr.mxu0 0.0
      %819 = vmatpush1.msra.mxu0 0.0
      %820 = vmatprep.subr.mxu0 0.0
      %821 = vmatpush1.msra.mxu0 0.0
      %822 = vmatprep.subr.mxu0 0.0
      %823 = vmatpush1.msra.mxu0 0.0
      %824 = vmatprep.subr.mxu0 0.0
      %825 = vmatpush1.msra.mxu0 0.0
      %826 = vmatprep.subr.mxu0 0.0
      %827 = vmatpush1.msra.mxu0 0.0
      %828 = vmatprep.subr.mxu0 0.0
      %829 = vmatpush1.msra.mxu0 0.0
      %830 = vmatprep.subr.mxu0 0.0
      %831 = vmatpush1.msra.mxu0 0.0
      %832 = vmatprep.subr.mxu0 0.0
      %833 = vmatpush1.msra.mxu0 0.0
      %834 = vmatprep.subr.mxu0 0.0
      %835 = vmatpush1.msra.mxu0 0.0
      %836 = vmatprep.subr.mxu0 0.0
      %837 = vmatpush1.msra.mxu0 0.0
      %838 = vmatprep.subr.mxu0 0.0
      %839 = vmatpush1.msra.mxu0 0.0
      %840 = vmatprep.subr.mxu0 0.0
      %841 = vmatpush1.msra.mxu0 0.0
      %842 = vmatprep.subr.mxu0 0.0
      %843 = vmatpush1.msra.mxu0 0.0
      %844 = vmatprep.subr.mxu0 0.0
      %845 = vmatpush1.msra.mxu0 0.0
      %846 = vmatprep.mubr.f32.mxu0 0.0
      %847 = vmatmul.mubr.f32.gmra.mrb[0].mxu0 %v680
      %v848 = vpop.f32.mrb[0].mxu0
      %v849 = vadd.f32 0.0, %v848
      %v850 = vpop.f32.mrb[0].mxu0
      %v851 = vadd.f32 0.0, %v850
      %852 = vmatprep.mubr.f32.mxu0 0.0
      %853 = vmatmul.mubr.f32.gmra.mrb[0].mxu0 %v683
      %v854 = vpop.f32.mrb[0].mxu0
      %v855 = vadd.f32 0.0, %v854
      %v856 = vpop.f32.mrb[0].mxu0
      %v857 = vadd.f32 0.0, %v856
      %858 = vmatprep.mubr.f32.mxu0 0.0
      %859 = vmatmul.mubr.f32.gmra.mrb[0].mxu0 %v686
      %v860 = vpop.f32.mrb[0].mxu0
      %v861 = vadd.f32 0.0, %v860
      %v862 = vpop.f32.mrb[0].mxu0
      %v863 = vadd.f32 0.0, %v862
      %864 = vmatprep.mubr.f32.mxu0 0.0
      %865 = vmatmul.mubr.f32.gmra.mrb[0].mxu0 %v689
      %v866 = vpop.f32.mrb[0].mxu0
      %v867 = vadd.f32 0.0, %v866
      %v868 = vpop.f32.mrb[0].mxu0
      %v869 = vadd.f32 0.0, %v868
      %870 = vmatprep.mubr.f32.mxu0 0.0
      %871 = vmatmul.mubr.f32.gmra.mrb[0].mxu0 %v692
      %v872 = vpop.f32.mrb[0].mxu0
      %v873 = vadd.f32 0.0, %v872
      %v874 = vpop.f32.mrb[0].mxu0
      %v875 = vadd.f32 0.0, %v874
      %876 = vmatprep.mubr.f32.mxu0 0.0
      %877 = vmatmul.mubr.f32.gmra.mrb[0].mxu0 %v695
      %v878 = vpop.f32.mrb[0].mxu0
      %v879 = vadd.f32 0.0, %v878
      %v880 = vpop.f32.mrb[0].mxu0
      %v881 = vadd.f32 0.0, %v880
      %882 = vmatprep.mubr.f32.mxu0 0.0
      %883 = vmatmul.mubr.f32.gmra.mrb[0].mxu0 %v698
      %v884 = vpop.f32.mrb[0].mxu0
      %v885 = vadd.f32 0.0, %v884
      %v886 = vpop.f32.mrb[0].mxu0
      %v887 = vadd.f32 0.0, %v886
      %888 = vmatprep.mubr.f32.mxu0 0.0
      %889 = vmatmul.mubr.f32.gmra.mrb[0].mxu0 %v701
      %v890 = vpop.f32.mrb[0].mxu0
      %v891 = vadd.f32 0.0, %v890
      %v892 = vpop.f32.mrb[0].mxu0
      %v893 = vadd.f32 0.0, %v892
      %894 = vmatprep.mubr.f32.mxu0 0.0
      %895 = vmatmul.mubr.f32.gmra.mrb[0].mxu0 %v704
      %v896 = vpop.f32.mrb[0].mxu0
      %v897 = vadd.f32 0.0, %v896
      %v898 = vpop.f32.mrb[0].mxu0
      %v899 = vadd.f32 0.0, %v898
      %900 = vmatprep.mubr.f32.mxu0 0.0
      %901 = vmatmul.mubr.f32.gmra.mrb[0].mxu0 %v707
      %v902 = vpop.f32.mrb[0].mxu0
      %v903 = vadd.f32 0.0, %v902
      %v904 = vpop.f32.mrb[0].mxu0
      %v905 = vadd.f32 0.0, %v904
      %906 = vmatprep.mubr.f32.mxu0 0.0
      %907 = vmatmul.mubr.f32.gmra.mrb[0].mxu0 %v710
      %v908 = vpop.f32.mrb[0].mxu0
      %v909 = vadd.f32 0.0, %v908
      %v910 = vpop.f32.mrb[0].mxu0
      %v911 = vadd.f32 0.0, %v910
      %912 = vmatprep.mubr.f32.mxu0 0.0
      %913 = vmatmul.mubr.f32.gmra.mrb[0].mxu0 %v713
      %v914 = vpop.f32.mrb[0].mxu0
      %v915 = vadd.f32 0.0, %v914
      %v916 = vpop.f32.mrb[0].mxu0
      %v917 = vadd.f32 0.0, %v916
      %918 = vmatprep.mubr.f32.mxu0 0.0
      %919 = vmatmul.mubr.f32.gmra.mrb[0].mxu0 %v716
      %v920 = vpop.f32.mrb[0].mxu0
      %v921 = vadd.f32 0.0, %v920
      %v922 = vpop.f32.mrb[0].mxu0
      %v923 = vadd.f32 0.0, %v922
      %924 = vmatprep.mubr.f32.mxu0 0.0
      %925 = vmatmul.mubr.f32.gmra.mrb[0].mxu0 %v719
      %v926 = vpop.f32.mrb[0].mxu0
      %v927 = vadd.f32 0.0, %v926
      %v928 = vpop.f32.mrb[0].mxu0
      %v929 = vadd.f32 0.0, %v928
      %930 = vmatprep.mubr.f32.mxu0 0.0
      %931 = vmatmul.mubr.f32.gmra.mrb[0].mxu0 %v722
      %v932 = vpop.f32.mrb[0].mxu0
      %v933 = vadd.f32 0.0, %v932
      %v934 = vpop.f32.mrb[0].mxu0
      %v935 = vadd.f32 0.0, %v934
      %936 = vmatprep.mubr.f32.mxu0 0.0
      %937 = vmatmul.mubr.f32.gmra.mrb[0].mxu0 %v725
      %v938 = vpop.f32.mrb[0].mxu0
      %v939 = vadd.f32 0.0, %v938
      %v940 = vpop.f32.mrb[0].mxu0
      %v941 = vadd.f32 0.0, %v940
      %942 = vmatprep.mubr.f32.mxu0 0.0
      %943 = vmatmul.mubr.f32.gmra.mrb[0].mxu0 %v728
      %v944 = vpop.f32.mrb[0].mxu0
      %v945 = vadd.f32 0.0, %v944
      %v946 = vpop.f32.mrb[0].mxu0
      %v947 = vadd.f32 0.0, %v946
      %948 = vmatprep.mubr.f32.mxu0 0.0
      %949 = vmatmul.mubr.f32.gmra.mrb[0].mxu0 %v731
      %v950 = vpop.f32.mrb[0].mxu0
      %v951 = vadd.f32 0.0, %v950
      %v952 = vpop.f32.mrb[0].mxu0
      %v953 = vadd.f32 0.0, %v952
      %954 = vmatprep.mubr.f32.mxu0 0.0
      %955 = vmatmul.mubr.f32.gmra.mrb[0].mxu0 %v734
      %v956 = vpop.f32.mrb[0].mxu0
      %v957 = vadd.f32 0.0, %v956
      %v958 = vpop.f32.mrb[0].mxu0
      %v959 = vadd.f32 0.0, %v958
      %960 = vmatprep.mubr.f32.mxu0 0.0
      %961 = vmatmul.mubr.f32.gmra.mrb[0].mxu0 %v737
      %v962 = vpop.f32.mrb[0].mxu0
      %v963 = vadd.f32 0.0, %v962
      %v964 = vpop.f32.mrb[0].mxu0
      %v965 = vadd.f32 0.0, %v964
      %966 = vmatprep.mubr.f32.mxu0 0.0
      %967 = vmatmul.mubr.f32.gmra.mrb[0].mxu0 %v740
      %v968 = vpop.f32.mrb[0].mxu0
      %v969 = vadd.f32 0.0, %v968
      %v970 = vpop.f32.mrb[0].mxu0
      %v971 = vadd.f32 0.0, %v970
      %972 = vmatprep.mubr.f32.mxu0 0.0
      %973 = vmatmul.mubr.f32.gmra.mrb[0].mxu0 %v743
      %v974 = vpop.f32.mrb[0].mxu0
      %v975 = vadd.f32 0.0, %v974
      %v976 = vpop.f32.mrb[0].mxu0
      %v977 = vadd.f32 0.0, %v976
      %978 = vmatprep.mubr.f32.mxu0 0.0
      %979 = vmatmul.mubr.f32.gmra.mrb[0].mxu0 %v746
      %v980 = vpop.f32.mrb[0].mxu0
      %v981 = vadd.f32 0.0, %v980
      %v982 = vpop.f32.mrb[0].mxu0
      %v983 = vadd.f32 0.0, %v982
      %984 = vmatprep.mubr.f32.mxu0 0.0
      %985 = vmatmul.mubr.f32.gmra.mrb[0].mxu0 %v749
      %v986 = vpop.f32.mrb[0].mxu0
      %v987 = vadd.f32 0.0, %v986
      %v988 = vpop.f32.mrb[0].mxu0
      %v989 = vadd.f32 0.0, %v988
      %990 = vmatprep.mubr.f32.mxu0 0.0
      %991 = vmatmul.mubr.f32.gmra.mrb[0].mxu0 %v752
      %v992 = vpop.f32.mrb[0].mxu0
      %v993 = vadd.f32 0.0, %v992
      %v994 = vpop.f32.mrb[0].mxu0
      %v995 = vadd.f32 0.0, %v994
      %996 = vmatprep.mubr.f32.mxu0 0.0
      %997 = vmatmul.mubr.f32.gmra.mrb[0].mxu0 %v755
      %v998 = vpop.f32.mrb[0].mxu0
      %v999 = vadd.f32 0.0, %v998
      %v1000 = vpop.f32.mrb[0].mxu0
      %v1001 = vadd.f32 0.0, %v1000
      %1002 = vmatprep.mubr.f32.mxu0 0.0
      %1003 = vmatmul.mubr.f32.gmra.mrb[0].mxu0 %v758
      %v1004 = vpop.f32.mrb[0].mxu0
      %v1005 = vadd.f32 0.0, %v1004
      %v1006 = vpop.f32.mrb[0].mxu0
      %v1007 = vadd.f32 0.0, %v1006
      %1008 = vmatprep.mubr.f32.mxu0 0.0
      %1009 = vmatmul.mubr.f32.gmra.mrb[0].mxu0 %v761
      %v1010 = vpop.f32.mrb[0].mxu0
      %v1011 = vadd.f32 0.0, %v1010
      %v1012 = vpop.f32.mrb[0].mxu0
      %v1013 = vadd.f32 0.0, %v1012
      %1014 = vmatprep.mubr.f32.mxu0 0.0
      %1015 = vmatmul.mubr.f32.gmra.mrb[0].mxu0 %v764
      %v1016 = vpop.f32.mrb[0].mxu0
      %v1017 = vadd.f32 0.0, %v1016
      %v1018 = vpop.f32.mrb[0].mxu0
      %v1019 = vadd.f32 0.0, %v1018
      %1020 = vmatprep.mubr.f32.mxu0 0.0
      %1021 = vmatmul.mubr.f32.gmra.mrb[0].mxu0 %v767
      %v1022 = vpop.f32.mrb[0].mxu0
      %v1023 = vadd.f32 0.0, %v1022
      %v1024 = vpop.f32.mrb[0].mxu0
      %v1025 = vadd.f32 0.0, %v1024
      %1026 = vmatprep.mubr.f32.mxu0 0.0
      %1027 = vmatmul.mubr.f32.gmra.mrb[0].mxu0 %v770
      %v1028 = vpop.f32.mrb[0].mxu0
      %v1029 = vadd.f32 0.0, %v1028
      %v1030 = vpop.f32.mrb[0].mxu0
      %v1031 = vadd.f32 0.0, %v1030
      %1032 = vmatprep.mubr.f32.mxu0 0.0
      %1033 = vmatmul.mubr.f32.gmra.mrb[0].mxu0 %v773
      %v1034 = vpop.f32.mrb[0].mxu0
      %v1035 = vadd.f32 0.0, %v1034
      %v1036 = vpop.f32.mrb[0].mxu0
      %v1037 = vadd.f32 0.0, %v1036
      %1038 = vdwg.mxu0
      %v1039 = vand.u32 2147483647, %v849
      %v1040 = vand.u32 2147483647, %v851
      %v1041 = vand.u32 2147483647, %v855
      %v1042 = vand.u32 2147483647, %v857
      %v1043 = vand.u32 2147483647, %v861
      %v1044 = vand.u32 2147483647, %v863
      %v1045 = vand.u32 2147483647, %v867
      %v1046 = vand.u32 2147483647, %v869
      %v1047 = vand.u32 2147483647, %v873
      %v1048 = vand.u32 2147483647, %v875
      %v1049 = vand.u32 2147483647, %v879
      %v1050 = vand.u32 2147483647, %v881
      %v1051 = vand.u32 2147483647, %v885
      %v1052 = vand.u32 2147483647, %v887
      %v1053 = vand.u32 2147483647, %v891
      %v1054 = vand.u32 2147483647, %v893
      %v1055 = vand.u32 2147483647, %v897
      %v1056 = vand.u32 2147483647, %v899
      %v1057 = vand.u32 2147483647, %v903
      %v1058 = vand.u32 2147483647, %v905
      %v1059 = vand.u32 2147483647, %v909
      %v1060 = vand.u32 2147483647, %v911
      %v1061 = vand.u32 2147483647, %v915
      %v1062 = vand.u32 2147483647, %v917
      %v1063 = vand.u32 2147483647, %v921
      %v1064 = vand.u32 2147483647, %v923
      %v1065 = vand.u32 2147483647, %v927
      %v1066 = vand.u32 2147483647, %v929
      %v1067 = vand.u32 2147483647, %v933
      %v1068 = vand.u32 2147483647, %v935
      %v1069 = vand.u32 2147483647, %v939
      %v1070 = vand.u32 2147483647, %v941
      %v1071 = vand.u32 2147483647, %v945
      %v1072 = vand.u32 2147483647, %v947
      %v1073 = vand.u32 2147483647, %v951
      %v1074 = vand.u32 2147483647, %v953
      %v1075 = vand.u32 2147483647, %v957
      %v1076 = vand.u32 2147483647, %v959
      %v1077 = vand.u32 2147483647, %v963
      %v1078 = vand.u32 2147483647, %v965
      %v1079 = vand.u32 2147483647, %v969
      %v1080 = vand.u32 2147483647, %v971
      %v1081 = vand.u32 2147483647, %v975
      %v1082 = vand.u32 2147483647, %v977
      %v1083 = vand.u32 2147483647, %v981
      %v1084 = vand.u32 2147483647, %v983
      %v1085 = vand.u32 2147483647, %v987
      %v1086 = vand.u32 2147483647, %v989
      %v1087 = vand.u32 2147483647, %v993
      %v1088 = vand.u32 2147483647, %v995
      %v1089 = vand.u32 2147483647, %v999
      %v1090 = vand.u32 2147483647, %v1001
      %v1091 = vand.u32 2147483647, %v1005
      %v1092 = vand.u32 2147483647, %v1007
      %v1093 = vand.u32 2147483647, %v1011
      %v1094 = vand.u32 2147483647, %v1013
      %v1095 = vand.u32 2147483647, %v1017
      %v1096 = vand.u32 2147483647, %v1019
      %v1097 = vand.u32 2147483647, %v1023
      %v1098 = vand.u32 2147483647, %v1025
      %v1099 = vand.u32 2147483647, %v1029
      %v1100 = vand.u32 2147483647, %v1031
      %v1101 = vand.u32 2147483647, %v1035
      %v1102 = vand.u32 2147483647, %v1037
      %s1103 = scalar_lea.vmem %s261, 64
      %v1104 = vld [vmem:[%s1103] sm:$0xff]
      %v1105 = vld [vmem:[%s1103 + $0x8] sm:$0xff]
      %v1106 = vld [vmem:[%s1103 + $0x10] sm:$0xff]
      %v1107 = vld [vmem:[%s1103 + $0x18] sm:$0xff]
      %v1108 = vld [vmem:[%s1103 + $0x20] sm:$0xff]
      %v1109 = vld [vmem:[%s1103 + $0x28] sm:$0xff]
      %v1110 = vld [vmem:[%s1103 + $0x30] sm:$0xff]
      %v1111 = vld [vmem:[%s1103 + $0x38] sm:$0xf]
      %s1112 = scalar_lea.vmem %s266, 64
      %v1113 = vld [vmem:[%s1112] sm:$0xff]
      %v1114 = vld [vmem:[%s1112 + $0x8] sm:$0xff]
      %v1115 = vld [vmem:[%s1112 + $0x10] sm:$0xff]
      %v1116 = vld [vmem:[%s1112 + $0x18] sm:$0xff]
      %v1117 = vld [vmem:[%s1112 + $0x20] sm:$0xff]
      %v1118 = vld [vmem:[%s1112 + $0x28] sm:$0xff]
      %v1119 = vld [vmem:[%s1112 + $0x30] sm:$0xff]
      %v1120 = vld [vmem:[%s1112 + $0x38] sm:$0xf]
      %v1121 = vsub.f32 %v1104, %v1113
      %v1122 = vsub.f32 %v1105, %v1114
      %v1123 = vsub.f32 %v1106, %v1115
      %v1124 = vsub.f32 %v1107, %v1116
      %v1125 = vsub.f32 %v1108, %v1117
      %v1126 = vsub.f32 %v1109, %v1118
      %v1127 = vsub.f32 %v1110, %v1119
      %v1128 = vsub.f32 %v1111, %v1120
      %v1130 = vsel %vm449, %v1128, 0
      %1132 = vmatprep.subr.mxu0 0.0
      %1133 = vmatpush1.msra.mxu0 %v1121
      %1134 = vmatprep.subr.mxu0 0.0
      %1135 = vmatpush1.msra.mxu0 %v1122
      %1136 = vmatprep.subr.mxu0 0.0
      %1137 = vmatpush1.msra.mxu0 %v1123
      %1138 = vmatprep.subr.mxu0 0.0
      %1139 = vmatpush1.msra.mxu0 %v1124
      %1140 = vmatprep.subr.mxu0 0.0
      %1141 = vmatpush1.msra.mxu0 %v1125
      %1142 = vmatprep.subr.mxu0 0.0
      %1143 = vmatpush1.msra.mxu0 %v1126
      %1144 = vmatprep.subr.mxu0 0.0
      %1145 = vmatpush1.msra.mxu0 %v1127
      %1146 = vmatprep.subr.mxu0 0.0
      %1147 = vmatpush1.msra.mxu0 %v1130
      %1148 = vmatprep.subr.mxu0 0.0
      %1149 = vmatpush1.msra.mxu0 0.0
      %1150 = vmatprep.subr.mxu0 0.0
      %1151 = vmatpush1.msra.mxu0 0.0
      %1152 = vmatprep.subr.mxu0 0.0
      %1153 = vmatpush1.msra.mxu0 0.0
      %1154 = vmatprep.subr.mxu0 0.0
      %1155 = vmatpush1.msra.mxu0 0.0
      %1156 = vmatprep.subr.mxu0 0.0
      %1157 = vmatpush1.msra.mxu0 0.0
      %1158 = vmatprep.subr.mxu0 0.0
      %1159 = vmatpush1.msra.mxu0 0.0
      %1160 = vmatprep.subr.mxu0 0.0
      %1161 = vmatpush1.msra.mxu0 0.0
      %1162 = vmatprep.subr.mxu0 0.0
      %1163 = vmatpush1.msra.mxu0 0.0
      %1164 = vmatprep.subr.mxu0 0.0
      %1165 = vmatpush1.msra.mxu0 0.0
      %1166 = vmatprep.subr.mxu0 0.0
      %1167 = vmatpush1.msra.mxu0 0.0
      %1168 = vmatprep.subr.mxu0 0.0
      %1169 = vmatpush1.msra.mxu0 0.0
      %1170 = vmatprep.subr.mxu0 0.0
      %1171 = vmatpush1.msra.mxu0 0.0
      %1172 = vmatprep.subr.mxu0 0.0
      %1173 = vmatpush1.msra.mxu0 0.0
      %1174 = vmatprep.subr.mxu0 0.0
      %1175 = vmatpush1.msra.mxu0 0.0
      %1176 = vmatprep.subr.mxu0 0.0
      %1177 = vmatpush1.msra.mxu0 0.0
      %1178 = vmatprep.subr.mxu0 0.0
      %1179 = vmatpush1.msra.mxu0 0.0
      %1180 = vmatprep.subr.mxu0 0.0
      %1181 = vmatpush1.msra.mxu0 0.0
      %1182 = vmatprep.subr.mxu0 0.0
      %1183 = vmatpush1.msra.mxu0 0.0
      %1184 = vmatprep.subr.mxu0 0.0
      %1185 = vmatpush1.msra.mxu0 0.0
      %1186 = vmatprep.subr.mxu0 0.0
      %1187 = vmatpush1.msra.mxu0 0.0
      %1188 = vmatprep.subr.mxu0 0.0
      %1189 = vmatpush1.msra.mxu0 0.0
      %1190 = vmatprep.subr.mxu0 0.0
      %1191 = vmatpush1.msra.mxu0 0.0
      %1192 = vmatprep.subr.mxu0 0.0
      %1193 = vmatpush1.msra.mxu0 0.0
      %1194 = vmatprep.subr.mxu0 0.0
      %1195 = vmatpush1.msra.mxu0 0.0
      %1196 = vmatprep.mubr.f32.mxu0 0.0
      %1197 = vmatmul.mubr.f32.gmra.mrb[0].mxu0 %v354
      %v1198 = vpop.f32.mrb[0].mxu0
      %v1199 = vadd.f32 0.0, %v1198
      %v1200 = vpop.f32.mrb[0].mxu0
      %1201 = vmatprep.mubr.f32.mxu0 0.0
      %1202 = vmatmul.mubr.f32.gmra.mrb[0].mxu0 %v357
      %v1203 = vpop.f32.mrb[0].mxu0
      %v1204 = vadd.f32 0.0, %v1203
      %v1205 = vpop.f32.mrb[0].mxu0
      %1206 = vmatprep.mubr.f32.mxu0 0.0
      %1207 = vmatmul.mubr.f32.gmra.mrb[0].mxu0 %v360
      %v1208 = vpop.f32.mrb[0].mxu0
      %v1209 = vadd.f32 0.0, %v1208
      %v1210 = vpop.f32.mrb[0].mxu0
      %1211 = vmatprep.mubr.f32.mxu0 0.0
      %1212 = vmatmul.mubr.f32.gmra.mrb[0].mxu0 %v363
      %v1213 = vpop.f32.mrb[0].mxu0
      %v1214 = vadd.f32 0.0, %v1213
      %v1215 = vpop.f32.mrb[0].mxu0
      %1216 = vmatprep.mubr.f32.mxu0 0.0
      %1217 = vmatmul.mubr.f32.gmra.mrb[0].mxu0 %v366
      %v1218 = vpop.f32.mrb[0].mxu0
      %v1219 = vadd.f32 0.0, %v1218
      %v1220 = vpop.f32.mrb[0].mxu0
      %1221 = vmatprep.mubr.f32.mxu0 0.0
      %1222 = vmatmul.mubr.f32.gmra.mrb[0].mxu0 %v369
      %v1223 = vpop.f32.mrb[0].mxu0
      %v1224 = vadd.f32 0.0, %v1223
      %v1225 = vpop.f32.mrb[0].mxu0
      %1226 = vmatprep.mubr.f32.mxu0 0.0
      %1227 = vmatmul.mubr.f32.gmra.mrb[0].mxu0 %v372
      %v1228 = vpop.f32.mrb[0].mxu0
      %v1229 = vadd.f32 0.0, %v1228
      %v1230 = vpop.f32.mrb[0].mxu0
      %1231 = vmatprep.mubr.f32.mxu0 0.0
      %1232 = vmatmul.mubr.f32.gmra.mrb[0].mxu0 %v375
      %v1233 = vpop.f32.mrb[0].mxu0
      %v1234 = vadd.f32 0.0, %v1233
      %v1235 = vpop.f32.mrb[0].mxu0
      %1236 = vmatprep.mubr.f32.mxu0 0.0
      %1237 = vmatmul.mubr.f32.gmra.mrb[0].mxu0 %v378
      %v1238 = vpop.f32.mrb[0].mxu0
      %v1239 = vadd.f32 0.0, %v1238
      %v1240 = vpop.f32.mrb[0].mxu0
      %1241 = vmatprep.mubr.f32.mxu0 0.0
      %1242 = vmatmul.mubr.f32.gmra.mrb[0].mxu0 %v381
      %v1243 = vpop.f32.mrb[0].mxu0
      %v1244 = vadd.f32 0.0, %v1243
      %v1245 = vpop.f32.mrb[0].mxu0
      %1246 = vmatprep.mubr.f32.mxu0 0.0
      %1247 = vmatmul.mubr.f32.gmra.mrb[0].mxu0 %v384
      %v1248 = vpop.f32.mrb[0].mxu0
      %v1249 = vadd.f32 0.0, %v1248
      %v1250 = vpop.f32.mrb[0].mxu0
      %1251 = vmatprep.mubr.f32.mxu0 0.0
      %1252 = vmatmul.mubr.f32.gmra.mrb[0].mxu0 %v387
      %v1253 = vpop.f32.mrb[0].mxu0
      %v1254 = vadd.f32 0.0, %v1253
      %v1255 = vpop.f32.mrb[0].mxu0
      %1256 = vmatprep.mubr.f32.mxu0 0.0
      %1257 = vmatmul.mubr.f32.gmra.mrb[0].mxu0 %v390
      %v1258 = vpop.f32.mrb[0].mxu0
      %v1259 = vadd.f32 0.0, %v1258
      %v1260 = vpop.f32.mrb[0].mxu0
      %1261 = vmatprep.mubr.f32.mxu0 0.0
      %1262 = vmatmul.mubr.f32.gmra.mrb[0].mxu0 %v393
      %v1263 = vpop.f32.mrb[0].mxu0
      %v1264 = vadd.f32 0.0, %v1263
      %v1265 = vpop.f32.mrb[0].mxu0
      %1266 = vmatprep.mubr.f32.mxu0 0.0
      %1267 = vmatmul.mubr.f32.gmra.mrb[0].mxu0 %v396
      %v1268 = vpop.f32.mrb[0].mxu0
      %v1269 = vadd.f32 0.0, %v1268
      %v1270 = vpop.f32.mrb[0].mxu0
      %1271 = vmatprep.mubr.f32.mxu0 0.0
      %1272 = vmatmul.mubr.f32.gmra.mrb[0].mxu0 %v399
      %v1273 = vpop.f32.mrb[0].mxu0
      %v1274 = vadd.f32 0.0, %v1273
      %v1275 = vpop.f32.mrb[0].mxu0
      %1276 = vmatprep.mubr.f32.mxu0 0.0
      %1277 = vmatmul.mubr.f32.gmra.mrb[0].mxu0 %v402
      %v1278 = vpop.f32.mrb[0].mxu0
      %v1279 = vadd.f32 0.0, %v1278
      %v1280 = vpop.f32.mrb[0].mxu0
      %1281 = vmatprep.mubr.f32.mxu0 0.0
      %1282 = vmatmul.mubr.f32.gmra.mrb[0].mxu0 %v405
      %v1283 = vpop.f32.mrb[0].mxu0
      %v1284 = vadd.f32 0.0, %v1283
      %v1285 = vpop.f32.mrb[0].mxu0
      %1286 = vmatprep.mubr.f32.mxu0 0.0
      %1287 = vmatmul.mubr.f32.gmra.mrb[0].mxu0 %v408
      %v1288 = vpop.f32.mrb[0].mxu0
      %v1289 = vadd.f32 0.0, %v1288
      %v1290 = vpop.f32.mrb[0].mxu0
      %1291 = vmatprep.mubr.f32.mxu0 0.0
      %1292 = vmatmul.mubr.f32.gmra.mrb[0].mxu0 %v411
      %v1293 = vpop.f32.mrb[0].mxu0
      %v1294 = vadd.f32 0.0, %v1293
      %v1295 = vpop.f32.mrb[0].mxu0
      %1296 = vmatprep.mubr.f32.mxu0 0.0
      %1297 = vmatmul.mubr.f32.gmra.mrb[0].mxu0 %v414
      %v1298 = vpop.f32.mrb[0].mxu0
      %v1299 = vadd.f32 0.0, %v1298
      %v1300 = vpop.f32.mrb[0].mxu0
      %1301 = vmatprep.mubr.f32.mxu0 0.0
      %1302 = vmatmul.mubr.f32.gmra.mrb[0].mxu0 %v417
      %v1303 = vpop.f32.mrb[0].mxu0
      %v1304 = vadd.f32 0.0, %v1303
      %v1305 = vpop.f32.mrb[0].mxu0
      %1306 = vmatprep.mubr.f32.mxu0 0.0
      %1307 = vmatmul.mubr.f32.gmra.mrb[0].mxu0 %v420
      %v1308 = vpop.f32.mrb[0].mxu0
      %v1309 = vadd.f32 0.0, %v1308
      %v1310 = vpop.f32.mrb[0].mxu0
      %1311 = vmatprep.mubr.f32.mxu0 0.0
      %1312 = vmatmul.mubr.f32.gmra.mrb[0].mxu0 %v423
      %v1313 = vpop.f32.mrb[0].mxu0
      %v1314 = vadd.f32 0.0, %v1313
      %v1315 = vpop.f32.mrb[0].mxu0
      %1316 = vmatprep.mubr.f32.mxu0 0.0
      %1317 = vmatmul.mubr.f32.gmra.mrb[0].mxu0 %v426
      %v1318 = vpop.f32.mrb[0].mxu0
      %v1319 = vadd.f32 0.0, %v1318
      %v1320 = vpop.f32.mrb[0].mxu0
      %1321 = vmatprep.mubr.f32.mxu0 0.0
      %1322 = vmatmul.mubr.f32.gmra.mrb[0].mxu0 %v429
      %v1323 = vpop.f32.mrb[0].mxu0
      %v1324 = vadd.f32 0.0, %v1323
      %v1325 = vpop.f32.mrb[0].mxu0
      %1326 = vmatprep.mubr.f32.mxu0 0.0
      %1327 = vmatmul.mubr.f32.gmra.mrb[0].mxu0 %v432
      %v1328 = vpop.f32.mrb[0].mxu0
      %v1329 = vadd.f32 0.0, %v1328
      %v1330 = vpop.f32.mrb[0].mxu0
      %1331 = vmatprep.mubr.f32.mxu0 0.0
      %1332 = vmatmul.mubr.f32.gmra.mrb[0].mxu0 %v435
      %v1333 = vpop.f32.mrb[0].mxu0
      %v1334 = vadd.f32 0.0, %v1333
      %v1335 = vpop.f32.mrb[0].mxu0
      %1336 = vmatprep.mubr.f32.mxu0 0.0
      %1337 = vmatmul.mubr.f32.gmra.mrb[0].mxu0 %v438
      %v1338 = vpop.f32.mrb[0].mxu0
      %v1339 = vadd.f32 0.0, %v1338
      %v1340 = vpop.f32.mrb[0].mxu0
      %1341 = vmatprep.mubr.f32.mxu0 0.0
      %1342 = vmatmul.mubr.f32.gmra.mrb[0].mxu0 %v441
      %v1343 = vpop.f32.mrb[0].mxu0
      %v1344 = vadd.f32 0.0, %v1343
      %v1345 = vpop.f32.mrb[0].mxu0
      %1346 = vmatprep.mubr.f32.mxu0 0.0
      %1347 = vmatmul.mubr.f32.gmra.mrb[0].mxu0 %v444
      %v1348 = vpop.f32.mrb[0].mxu0
      %v1349 = vadd.f32 0.0, %v1348
      %v1350 = vpop.f32.mrb[0].mxu0
      %1351 = vmatprep.mubr.f32.mxu0 0.0
      %1352 = vmatmul.mubr.f32.gmra.mrb[0].mxu0 %v447
      %v1353 = vpop.f32.mrb[0].mxu0
      %v1354 = vadd.f32 0.0, %v1353
      %v1355 = vpop.f32.mrb[0].mxu0
      %1356 = vdwg.mxu0
      %v1358 = vsel %vm678, %v1199, 0
      %v1361 = vsel %vm678, %v1204, 0
      %v1364 = vsel %vm678, %v1209, 0
      %v1367 = vsel %vm678, %v1214, 0
      %v1370 = vsel %vm678, %v1219, 0
      %v1373 = vsel %vm678, %v1224, 0
      %v1376 = vsel %vm678, %v1229, 0
      %v1379 = vsel %vm678, %v1234, 0
      %v1382 = vsel %vm678, %v1239, 0
      %v1385 = vsel %vm678, %v1244, 0
      %v1388 = vsel %vm678, %v1249, 0
      %v1391 = vsel %vm678, %v1254, 0
      %v1394 = vsel %vm678, %v1259, 0
      %v1397 = vsel %vm678, %v1264, 0
      %v1400 = vsel %vm678, %v1269, 0
      %v1403 = vsel %vm678, %v1274, 0
      %v1406 = vsel %vm678, %v1279, 0
      %v1409 = vsel %vm678, %v1284, 0
      %v1412 = vsel %vm678, %v1289, 0
      %v1415 = vsel %vm678, %v1294, 0
      %v1418 = vsel %vm678, %v1299, 0
      %v1421 = vsel %vm678, %v1304, 0
      %v1424 = vsel %vm678, %v1309, 0
      %v1427 = vsel %vm678, %v1314, 0
      %v1430 = vsel %vm678, %v1319, 0
      %v1433 = vsel %vm678, %v1324, 0
      %v1436 = vsel %vm678, %v1329, 0
      %v1439 = vsel %vm678, %v1334, 0
      %v1442 = vsel %vm678, %v1339, 0
      %v1445 = vsel %vm678, %v1344, 0
      %v1448 = vsel %vm678, %v1349, 0
      %v1451 = vsel %vm678, %v1354, 0
      %1453 = vmatprep.subr.mxu0 %v305
      %1454 = vmatpush1.msra.mxu0 %v304
      %1455 = vmatprep.subr.mxu0 %v307
      %1456 = vmatpush1.msra.mxu0 %v306
      %1457 = vmatprep.subr.mxu0 %v309
      %1458 = vmatpush1.msra.mxu0 %v308
      %1459 = vmatprep.subr.mxu0 %v311
      %1460 = vmatpush1.msra.mxu0 %v310
      %1461 = vmatprep.subr.mxu0 %v313
      %1462 = vmatpush1.msra.mxu0 %v312
      %1463 = vmatprep.subr.mxu0 %v315
      %1464 = vmatpush1.msra.mxu0 %v314
      %1465 = vmatprep.subr.mxu0 %v317
      %1466 = vmatpush1.msra.mxu0 %v316
      %1467 = vmatprep.subr.mxu0 %v319
      %1468 = vmatpush1.msra.mxu0 %v318
      %1469 = vmatprep.subr.mxu0 %v321
      %1470 = vmatpush1.msra.mxu0 %v320
      %1471 = vmatprep.subr.mxu0 %v323
      %1472 = vmatpush1.msra.mxu0 %v322
      %1473 = vmatprep.subr.mxu0 %v325
      %1474 = vmatpush1.msra.mxu0 %v324
      %1475 = vmatprep.subr.mxu0 %v780
      %1476 = vmatpush1.msra.mxu0 %v777
      %1477 = vmatprep.subr.mxu0 0.0
      %1478 = vmatpush1.msra.mxu0 0.0
      %1479 = vmatprep.subr.mxu0 0.0
      %1480 = vmatpush1.msra.mxu0 0.0
      %1481 = vmatprep.subr.mxu0 0.0
      %1482 = vmatpush1.msra.mxu0 0.0
      %1483 = vmatprep.subr.mxu0 0.0
      %1484 = vmatpush1.msra.mxu0 0.0
      %1485 = vmatprep.subr.mxu0 0.0
      %1486 = vmatpush1.msra.mxu0 0.0
      %1487 = vmatprep.subr.mxu0 0.0
      %1488 = vmatpush1.msra.mxu0 0.0
      %1489 = vmatprep.subr.mxu0 0.0
      %1490 = vmatpush1.msra.mxu0 0.0
      %1491 = vmatprep.subr.mxu0 0.0
      %1492 = vmatpush1.msra.mxu0 0.0
      %1493 = vmatprep.subr.mxu0 0.0
      %1494 = vmatpush1.msra.mxu0 0.0
      %1495 = vmatprep.subr.mxu0 0.0
      %1496 = vmatpush1.msra.mxu0 0.0
      %1497 = vmatprep.subr.mxu0 0.0
      %1498 = vmatpush1.msra.mxu0 0.0
      %1499 = vmatprep.subr.mxu0 0.0
      %1500 = vmatpush1.msra.mxu0 0.0
      %1501 = vmatprep.subr.mxu0 0.0
      %1502 = vmatpush1.msra.mxu0 0.0
      %1503 = vmatprep.subr.mxu0 0.0
      %1504 = vmatpush1.msra.mxu0 0.0
      %1505 = vmatprep.subr.mxu0 0.0
      %1506 = vmatpush1.msra.mxu0 0.0
      %1507 = vmatprep.subr.mxu0 0.0
      %1508 = vmatpush1.msra.mxu0 0.0
      %1509 = vmatprep.subr.mxu0 0.0
      %1510 = vmatpush1.msra.mxu0 0.0
      %1511 = vmatprep.subr.mxu0 0.0
      %1512 = vmatpush1.msra.mxu0 0.0
      %1513 = vmatprep.subr.mxu0 0.0
      %1514 = vmatpush1.msra.mxu0 0.0
      %1515 = vmatprep.subr.mxu0 0.0
      %1516 = vmatpush1.msra.mxu0 0.0
      %1517 = vmatprep.mubr.f32.mxu0 0.0
      %1518 = vmatmul.mubr.f32.gmra.mrb[0].mxu0 %v1358
      %v1519 = vpop.f32.mrb[0].mxu0
      %v1520 = vadd.f32 0.0, %v1519
      %v1521 = vpop.f32.mrb[0].mxu0
      %v1522 = vadd.f32 0.0, %v1521
      %1523 = vmatprep.mubr.f32.mxu0 0.0
      %1524 = vmatmul.mubr.f32.gmra.mrb[0].mxu0 %v1361
      %v1525 = vpop.f32.mrb[0].mxu0
      %v1526 = vadd.f32 0.0, %v1525
      %v1527 = vpop.f32.mrb[0].mxu0
      %v1528 = vadd.f32 0.0, %v1527
      %1529 = vmatprep.mubr.f32.mxu0 0.0
      %1530 = vmatmul.mubr.f32.gmra.mrb[0].mxu0 %v1364
      %v1531 = vpop.f32.mrb[0].mxu0
      %v1532 = vadd.f32 0.0, %v1531
      %v1533 = vpop.f32.mrb[0].mxu0
      %v1534 = vadd.f32 0.0, %v1533
      %1535 = vmatprep.mubr.f32.mxu0 0.0
      %1536 = vmatmul.mubr.f32.gmra.mrb[0].mxu0 %v1367
      %v1537 = vpop.f32.mrb[0].mxu0
      %v1538 = vadd.f32 0.0, %v1537
      %v1539 = vpop.f32.mrb[0].mxu0
      %v1540 = vadd.f32 0.0, %v1539
      %1541 = vmatprep.mubr.f32.mxu0 0.0
      %1542 = vmatmul.mubr.f32.gmra.mrb[0].mxu0 %v1370
      %v1543 = vpop.f32.mrb[0].mxu0
      %v1544 = vadd.f32 0.0, %v1543
      %v1545 = vpop.f32.mrb[0].mxu0
      %v1546 = vadd.f32 0.0, %v1545
      %1547 = vmatprep.mubr.f32.mxu0 0.0
      %1548 = vmatmul.mubr.f32.gmra.mrb[0].mxu0 %v1373
      %v1549 = vpop.f32.mrb[0].mxu0
      %v1550 = vadd.f32 0.0, %v1549
      %v1551 = vpop.f32.mrb[0].mxu0
      %v1552 = vadd.f32 0.0, %v1551
      %1553 = vmatprep.mubr.f32.mxu0 0.0
      %1554 = vmatmul.mubr.f32.gmra.mrb[0].mxu0 %v1376
      %v1555 = vpop.f32.mrb[0].mxu0
      %v1556 = vadd.f32 0.0, %v1555
      %v1557 = vpop.f32.mrb[0].mxu0
      %v1558 = vadd.f32 0.0, %v1557
      %1559 = vmatprep.mubr.f32.mxu0 0.0
      %1560 = vmatmul.mubr.f32.gmra.mrb[0].mxu0 %v1379
      %v1561 = vpop.f32.mrb[0].mxu0
      %v1562 = vadd.f32 0.0, %v1561
      %v1563 = vpop.f32.mrb[0].mxu0
      %v1564 = vadd.f32 0.0, %v1563
      %1565 = vmatprep.mubr.f32.mxu0 0.0
      %1566 = vmatmul.mubr.f32.gmra.mrb[0].mxu0 %v1382
      %v1567 = vpop.f32.mrb[0].mxu0
      %v1568 = vadd.f32 0.0, %v1567
      %v1569 = vpop.f32.mrb[0].mxu0
      %v1570 = vadd.f32 0.0, %v1569
      %1571 = vmatprep.mubr.f32.mxu0 0.0
      %1572 = vmatmul.mubr.f32.gmra.mrb[0].mxu0 %v1385
      %v1573 = vpop.f32.mrb[0].mxu0
      %v1574 = vadd.f32 0.0, %v1573
      %v1575 = vpop.f32.mrb[0].mxu0
      %v1576 = vadd.f32 0.0, %v1575
      %1577 = vmatprep.mubr.f32.mxu0 0.0
      %1578 = vmatmul.mubr.f32.gmra.mrb[0].mxu0 %v1388
      %v1579 = vpop.f32.mrb[0].mxu0
      %v1580 = vadd.f32 0.0, %v1579
      %v1581 = vpop.f32.mrb[0].mxu0
      %v1582 = vadd.f32 0.0, %v1581
      %1583 = vmatprep.mubr.f32.mxu0 0.0
      %1584 = vmatmul.mubr.f32.gmra.mrb[0].mxu0 %v1391
      %v1585 = vpop.f32.mrb[0].mxu0
      %v1586 = vadd.f32 0.0, %v1585
      %v1587 = vpop.f32.mrb[0].mxu0
      %v1588 = vadd.f32 0.0, %v1587
      %1589 = vmatprep.mubr.f32.mxu0 0.0
      %1590 = vmatmul.mubr.f32.gmra.mrb[0].mxu0 %v1394
      %v1591 = vpop.f32.mrb[0].mxu0
      %v1592 = vadd.f32 0.0, %v1591
      %v1593 = vpop.f32.mrb[0].mxu0
      %v1594 = vadd.f32 0.0, %v1593
      %1595 = vmatprep.mubr.f32.mxu0 0.0
      %1596 = vmatmul.mubr.f32.gmra.mrb[0].mxu0 %v1397
      %v1597 = vpop.f32.mrb[0].mxu0
      %v1598 = vadd.f32 0.0, %v1597
      %v1599 = vpop.f32.mrb[0].mxu0
      %v1600 = vadd.f32 0.0, %v1599
      %1601 = vmatprep.mubr.f32.mxu0 0.0
      %1602 = vmatmul.mubr.f32.gmra.mrb[0].mxu0 %v1400
      %v1603 = vpop.f32.mrb[0].mxu0
      %v1604 = vadd.f32 0.0, %v1603
      %v1605 = vpop.f32.mrb[0].mxu0
      %v1606 = vadd.f32 0.0, %v1605
      %1607 = vmatprep.mubr.f32.mxu0 0.0
      %1608 = vmatmul.mubr.f32.gmra.mrb[0].mxu0 %v1403
      %v1609 = vpop.f32.mrb[0].mxu0
      %v1610 = vadd.f32 0.0, %v1609
      %v1611 = vpop.f32.mrb[0].mxu0
      %v1612 = vadd.f32 0.0, %v1611
      %1613 = vmatprep.mubr.f32.mxu0 0.0
      %1614 = vmatmul.mubr.f32.gmra.mrb[0].mxu0 %v1406
      %v1615 = vpop.f32.mrb[0].mxu0
      %v1616 = vadd.f32 0.0, %v1615
      %v1617 = vpop.f32.mrb[0].mxu0
      %v1618 = vadd.f32 0.0, %v1617
      %1619 = vmatprep.mubr.f32.mxu0 0.0
      %1620 = vmatmul.mubr.f32.gmra.mrb[0].mxu0 %v1409
      %v1621 = vpop.f32.mrb[0].mxu0
      %v1622 = vadd.f32 0.0, %v1621
      %v1623 = vpop.f32.mrb[0].mxu0
      %v1624 = vadd.f32 0.0, %v1623
      %1625 = vmatprep.mubr.f32.mxu0 0.0
      %1626 = vmatmul.mubr.f32.gmra.mrb[0].mxu0 %v1412
      %v1627 = vpop.f32.mrb[0].mxu0
      %v1628 = vadd.f32 0.0, %v1627
      %v1629 = vpop.f32.mrb[0].mxu0
      %v1630 = vadd.f32 0.0, %v1629
      %1631 = vmatprep.mubr.f32.mxu0 0.0
      %1632 = vmatmul.mubr.f32.gmra.mrb[0].mxu0 %v1415
      %v1633 = vpop.f32.mrb[0].mxu0
      %v1634 = vadd.f32 0.0, %v1633
      %v1635 = vpop.f32.mrb[0].mxu0
      %v1636 = vadd.f32 0.0, %v1635
      %1637 = vmatprep.mubr.f32.mxu0 0.0
      %1638 = vmatmul.mubr.f32.gmra.mrb[0].mxu0 %v1418
      %v1639 = vpop.f32.mrb[0].mxu0
      %v1640 = vadd.f32 0.0, %v1639
      %v1641 = vpop.f32.mrb[0].mxu0
      %v1642 = vadd.f32 0.0, %v1641
      %1643 = vmatprep.mubr.f32.mxu0 0.0
      %1644 = vmatmul.mubr.f32.gmra.mrb[0].mxu0 %v1421
      %v1645 = vpop.f32.mrb[0].mxu0
      %v1646 = vadd.f32 0.0, %v1645
      %v1647 = vpop.f32.mrb[0].mxu0
      %v1648 = vadd.f32 0.0, %v1647
      %1649 = vmatprep.mubr.f32.mxu0 0.0
      %1650 = vmatmul.mubr.f32.gmra.mrb[0].mxu0 %v1424
      %v1651 = vpop.f32.mrb[0].mxu0
      %v1652 = vadd.f32 0.0, %v1651
      %v1653 = vpop.f32.mrb[0].mxu0
      %v1654 = vadd.f32 0.0, %v1653
      %1655 = vmatprep.mubr.f32.mxu0 0.0
      %1656 = vmatmul.mubr.f32.gmra.mrb[0].mxu0 %v1427
      %v1657 = vpop.f32.mrb[0].mxu0
      %v1658 = vadd.f32 0.0, %v1657
      %v1659 = vpop.f32.mrb[0].mxu0
      %v1660 = vadd.f32 0.0, %v1659
      %1661 = vmatprep.mubr.f32.mxu0 0.0
      %1662 = vmatmul.mubr.f32.gmra.mrb[0].mxu0 %v1430
      %v1663 = vpop.f32.mrb[0].mxu0
      %v1664 = vadd.f32 0.0, %v1663
      %v1665 = vpop.f32.mrb[0].mxu0
      %v1666 = vadd.f32 0.0, %v1665
      %1667 = vmatprep.mubr.f32.mxu0 0.0
      %1668 = vmatmul.mubr.f32.gmra.mrb[0].mxu0 %v1433
      %v1669 = vpop.f32.mrb[0].mxu0
      %v1670 = vadd.f32 0.0, %v1669
      %v1671 = vpop.f32.mrb[0].mxu0
      %v1672 = vadd.f32 0.0, %v1671
      %1673 = vmatprep.mubr.f32.mxu0 0.0
      %1674 = vmatmul.mubr.f32.gmra.mrb[0].mxu0 %v1436
      %v1675 = vpop.f32.mrb[0].mxu0
      %v1676 = vadd.f32 0.0, %v1675
      %v1677 = vpop.f32.mrb[0].mxu0
      %v1678 = vadd.f32 0.0, %v1677
      %1679 = vmatprep.mubr.f32.mxu0 0.0
      %1680 = vmatmul.mubr.f32.gmra.mrb[0].mxu0 %v1439
      %v1681 = vpop.f32.mrb[0].mxu0
      %v1682 = vadd.f32 0.0, %v1681
      %v1683 = vpop.f32.mrb[0].mxu0
      %v1684 = vadd.f32 0.0, %v1683
      %1685 = vmatprep.mubr.f32.mxu0 0.0
      %1686 = vmatmul.mubr.f32.gmra.mrb[0].mxu0 %v1442
      %v1687 = vpop.f32.mrb[0].mxu0
      %v1688 = vadd.f32 0.0, %v1687
      %v1689 = vpop.f32.mrb[0].mxu0
      %v1690 = vadd.f32 0.0, %v1689
      %1691 = vmatprep.mubr.f32.mxu0 0.0
      %1692 = vmatmul.mubr.f32.gmra.mrb[0].mxu0 %v1445
      %v1693 = vpop.f32.mrb[0].mxu0
      %v1694 = vadd.f32 0.0, %v1693
      %v1695 = vpop.f32.mrb[0].mxu0
      %v1696 = vadd.f32 0.0, %v1695
      %1697 = vmatprep.mubr.f32.mxu0 0.0
      %1698 = vmatmul.mubr.f32.gmra.mrb[0].mxu0 %v1448
      %v1699 = vpop.f32.mrb[0].mxu0
      %v1700 = vadd.f32 0.0, %v1699
      %v1701 = vpop.f32.mrb[0].mxu0
      %v1702 = vadd.f32 0.0, %v1701
      %1703 = vmatprep.mubr.f32.mxu0 0.0
      %1704 = vmatmul.mubr.f32.gmra.mrb[0].mxu0 %v1451
      %v1705 = vpop.f32.mrb[0].mxu0
      %v1706 = vadd.f32 0.0, %v1705
      %v1707 = vpop.f32.mrb[0].mxu0
      %v1708 = vadd.f32 0.0, %v1707
      %1709 = vdwg.mxu0
      %v1710 = vand.u32 2147483647, %v1520
      %v1711 = vand.u32 2147483647, %v1522
      %v1712 = vand.u32 2147483647, %v1526
      %v1713 = vand.u32 2147483647, %v1528
      %v1714 = vand.u32 2147483647, %v1532
      %v1715 = vand.u32 2147483647, %v1534
      %v1716 = vand.u32 2147483647, %v1538
      %v1717 = vand.u32 2147483647, %v1540
      %v1718 = vand.u32 2147483647, %v1544
      %v1719 = vand.u32 2147483647, %v1546
      %v1720 = vand.u32 2147483647, %v1550
      %v1721 = vand.u32 2147483647, %v1552
      %v1722 = vand.u32 2147483647, %v1556
      %v1723 = vand.u32 2147483647, %v1558
      %v1724 = vand.u32 2147483647, %v1562
      %v1725 = vand.u32 2147483647, %v1564
      %v1726 = vand.u32 2147483647, %v1568
      %v1727 = vand.u32 2147483647, %v1570
      %v1728 = vand.u32 2147483647, %v1574
      %v1729 = vand.u32 2147483647, %v1576
      %v1730 = vand.u32 2147483647, %v1580
      %v1731 = vand.u32 2147483647, %v1582
      %v1732 = vand.u32 2147483647, %v1586
      %v1733 = vand.u32 2147483647, %v1588
      %v1734 = vand.u32 2147483647, %v1592
      %v1735 = vand.u32 2147483647, %v1594
      %v1736 = vand.u32 2147483647, %v1598
      %v1737 = vand.u32 2147483647, %v1600
      %v1738 = vand.u32 2147483647, %v1604
      %v1739 = vand.u32 2147483647, %v1606
      %v1740 = vand.u32 2147483647, %v1610
      %v1741 = vand.u32 2147483647, %v1612
      %v1742 = vand.u32 2147483647, %v1616
      %v1743 = vand.u32 2147483647, %v1618
      %v1744 = vand.u32 2147483647, %v1622
      %v1745 = vand.u32 2147483647, %v1624
      %v1746 = vand.u32 2147483647, %v1628
      %v1747 = vand.u32 2147483647, %v1630
      %v1748 = vand.u32 2147483647, %v1634
      %v1749 = vand.u32 2147483647, %v1636
      %v1750 = vand.u32 2147483647, %v1640
      %v1751 = vand.u32 2147483647, %v1642
      %v1752 = vand.u32 2147483647, %v1646
      %v1753 = vand.u32 2147483647, %v1648
      %v1754 = vand.u32 2147483647, %v1652
      %v1755 = vand.u32 2147483647, %v1654
      %v1756 = vand.u32 2147483647, %v1658
      %v1757 = vand.u32 2147483647, %v1660
      %v1758 = vand.u32 2147483647, %v1664
      %v1759 = vand.u32 2147483647, %v1666
      %v1760 = vand.u32 2147483647, %v1670
      %v1761 = vand.u32 2147483647, %v1672
      %v1762 = vand.u32 2147483647, %v1676
      %v1763 = vand.u32 2147483647, %v1678
      %v1764 = vand.u32 2147483647, %v1682
      %v1765 = vand.u32 2147483647, %v1684
      %v1766 = vand.u32 2147483647, %v1688
      %v1767 = vand.u32 2147483647, %v1690
      %v1768 = vand.u32 2147483647, %v1694
      %v1769 = vand.u32 2147483647, %v1696
      %v1770 = vand.u32 2147483647, %v1700
      %v1771 = vand.u32 2147483647, %v1702
      %v1772 = vand.u32 2147483647, %v1706
      %v1773 = vand.u32 2147483647, %v1708
      %v1774 = vadd.f32 %v1039, %v1710
      %v1775 = vadd.f32 %v1040, %v1711
      %v1776 = vadd.f32 %v1041, %v1712
      %v1777 = vadd.f32 %v1042, %v1713
      %v1778 = vadd.f32 %v1043, %v1714
      %v1779 = vadd.f32 %v1044, %v1715
      %v1780 = vadd.f32 %v1045, %v1716
      %v1781 = vadd.f32 %v1046, %v1717
      %v1782 = vadd.f32 %v1047, %v1718
      %v1783 = vadd.f32 %v1048, %v1719
      %v1784 = vadd.f32 %v1049, %v1720
      %v1785 = vadd.f32 %v1050, %v1721
      %v1786 = vadd.f32 %v1051, %v1722
      %v1787 = vadd.f32 %v1052, %v1723
      %v1788 = vadd.f32 %v1053, %v1724
      %v1789 = vadd.f32 %v1054, %v1725
      %v1790 = vadd.f32 %v1055, %v1726
      %v1791 = vadd.f32 %v1056, %v1727
      %v1792 = vadd.f32 %v1057, %v1728
      %v1793 = vadd.f32 %v1058, %v1729
      %v1794 = vadd.f32 %v1059, %v1730
      %v1795 = vadd.f32 %v1060, %v1731
      %v1796 = vadd.f32 %v1061, %v1732
      %v1797 = vadd.f32 %v1062, %v1733
      %v1798 = vadd.f32 %v1063, %v1734
      %v1799 = vadd.f32 %v1064, %v1735
      %v1800 = vadd.f32 %v1065, %v1736
      %v1801 = vadd.f32 %v1066, %v1737
      %v1802 = vadd.f32 %v1067, %v1738
      %v1803 = vadd.f32 %v1068, %v1739
      %v1804 = vadd.f32 %v1069, %v1740
      %v1805 = vadd.f32 %v1070, %v1741
      %v1806 = vadd.f32 %v1071, %v1742
      %v1807 = vadd.f32 %v1072, %v1743
      %v1808 = vadd.f32 %v1073, %v1744
      %v1809 = vadd.f32 %v1074, %v1745
      %v1810 = vadd.f32 %v1075, %v1746
      %v1811 = vadd.f32 %v1076, %v1747
      %v1812 = vadd.f32 %v1077, %v1748
      %v1813 = vadd.f32 %v1078, %v1749
      %v1814 = vadd.f32 %v1079, %v1750
      %v1815 = vadd.f32 %v1080, %v1751
      %v1816 = vadd.f32 %v1081, %v1752
      %v1817 = vadd.f32 %v1082, %v1753
      %v1818 = vadd.f32 %v1083, %v1754
      %v1819 = vadd.f32 %v1084, %v1755
      %v1820 = vadd.f32 %v1085, %v1756
      %v1821 = vadd.f32 %v1086, %v1757
      %v1822 = vadd.f32 %v1087, %v1758
      %v1823 = vadd.f32 %v1088, %v1759
      %v1824 = vadd.f32 %v1089, %v1760
      %v1825 = vadd.f32 %v1090, %v1761
      %v1826 = vadd.f32 %v1091, %v1762
      %v1827 = vadd.f32 %v1092, %v1763
      %v1828 = vadd.f32 %v1093, %v1764
      %v1829 = vadd.f32 %v1094, %v1765
      %v1830 = vadd.f32 %v1095, %v1766
      %v1831 = vadd.f32 %v1096, %v1767
      %v1832 = vadd.f32 %v1097, %v1768
      %v1833 = vadd.f32 %v1098, %v1769
      %v1834 = vadd.f32 %v1099, %v1770
      %v1835 = vadd.f32 %v1100, %v1771
      %v1836 = vadd.f32 %v1101, %v1772
      %v1837 = vadd.f32 %v1102, %v1773
      %s1838 = scalar_lea.vmem %s261, 128
      %v1839 = vld [vmem:[%s1838] sm:$0xff]
      %v1840 = vld [vmem:[%s1838 + $0x8] sm:$0xff]
      %v1841 = vld [vmem:[%s1838 + $0x10] sm:$0xff]
      %v1842 = vld [vmem:[%s1838 + $0x18] sm:$0xff]
      %v1843 = vld [vmem:[%s1838 + $0x20] sm:$0xff]
      %v1844 = vld [vmem:[%s1838 + $0x28] sm:$0xff]
      %v1845 = vld [vmem:[%s1838 + $0x30] sm:$0xff]
      %v1846 = vld [vmem:[%s1838 + $0x38] sm:$0xf]
      %s1847 = scalar_lea.vmem %s266, 128
      %v1848 = vld [vmem:[%s1847] sm:$0xff]
      %v1849 = vld [vmem:[%s1847 + $0x8] sm:$0xff]
      %v1850 = vld [vmem:[%s1847 + $0x10] sm:$0xff]
      %v1851 = vld [vmem:[%s1847 + $0x18] sm:$0xff]
      %v1852 = vld [vmem:[%s1847 + $0x20] sm:$0xff]
      %v1853 = vld [vmem:[%s1847 + $0x28] sm:$0xff]
      %v1854 = vld [vmem:[%s1847 + $0x30] sm:$0xff]
      %v1855 = vld [vmem:[%s1847 + $0x38] sm:$0xf]
      %v1856 = vsub.f32 %v1839, %v1848
      %v1857 = vsub.f32 %v1840, %v1849
      %v1858 = vsub.f32 %v1841, %v1850
      %v1859 = vsub.f32 %v1842, %v1851
      %v1860 = vsub.f32 %v1843, %v1852
      %v1861 = vsub.f32 %v1844, %v1853
      %v1862 = vsub.f32 %v1845, %v1854
      %v1863 = vsub.f32 %v1846, %v1855
      %v1865 = vsel %vm449, %v1863, 0
      %1867 = vmatprep.subr.mxu0 0.0
      %1868 = vmatpush1.msra.mxu0 %v1856
      %1869 = vmatprep.subr.mxu0 0.0
      %1870 = vmatpush1.msra.mxu0 %v1857
      %1871 = vmatprep.subr.mxu0 0.0
      %1872 = vmatpush1.msra.mxu0 %v1858
      %1873 = vmatprep.subr.mxu0 0.0
      %1874 = vmatpush1.msra.mxu0 %v1859
      %1875 = vmatprep.subr.mxu0 0.0
      %1876 = vmatpush1.msra.mxu0 %v1860
      %1877 = vmatprep.subr.mxu0 0.0
      %1878 = vmatpush1.msra.mxu0 %v1861
      %1879 = vmatprep.subr.mxu0 0.0
      %1880 = vmatpush1.msra.mxu0 %v1862
      %1881 = vmatprep.subr.mxu0 0.0
      %1882 = vmatpush1.msra.mxu0 %v1865
      %1883 = vmatprep.subr.mxu0 0.0
      %1884 = vmatpush1.msra.mxu0 0.0
      %1885 = vmatprep.subr.mxu0 0.0
      %1886 = vmatpush1.msra.mxu0 0.0
      %1887 = vmatprep.subr.mxu0 0.0
      %1888 = vmatpush1.msra.mxu0 0.0
      %1889 = vmatprep.subr.mxu0 0.0
      %1890 = vmatpush1.msra.mxu0 0.0
      %1891 = vmatprep.subr.mxu0 0.0
      %1892 = vmatpush1.msra.mxu0 0.0
      %1893 = vmatprep.subr.mxu0 0.0
      %1894 = vmatpush1.msra.mxu0 0.0
      %1895 = vmatprep.subr.mxu0 0.0
      %1896 = vmatpush1.msra.mxu0 0.0
      %1897 = vmatprep.subr.mxu0 0.0
      %1898 = vmatpush1.msra.mxu0 0.0
      %1899 = vmatprep.subr.mxu0 0.0
      %1900 = vmatpush1.msra.mxu0 0.0
      %1901 = vmatprep.subr.mxu0 0.0
      %1902 = vmatpush1.msra.mxu0 0.0
      %1903 = vmatprep.subr.mxu0 0.0
      %1904 = vmatpush1.msra.mxu0 0.0
      %1905 = vmatprep.subr.mxu0 0.0
      %1906 = vmatpush1.msra.mxu0 0.0
      %1907 = vmatprep.subr.mxu0 0.0
      %1908 = vmatpush1.msra.mxu0 0.0
      %1909 = vmatprep.subr.mxu0 0.0
      %1910 = vmatpush1.msra.mxu0 0.0
      %1911 = vmatprep.subr.mxu0 0.0
      %1912 = vmatpush1.msra.mxu0 0.0
      %1913 = vmatprep.subr.mxu0 0.0
      %1914 = vmatpush1.msra.mxu0 0.0
      %1915 = vmatprep.subr.mxu0 0.0
      %1916 = vmatpush1.msra.mxu0 0.0
      %1917 = vmatprep.subr.mxu0 0.0
      %1918 = vmatpush1.msra.mxu0 0.0
      %1919 = vmatprep.subr.mxu0 0.0
      %1920 = vmatpush1.msra.mxu0 0.0
      %1921 = vmatprep.subr.mxu0 0.0
      %1922 = vmatpush1.msra.mxu0 0.0
      %1923 = vmatprep.subr.mxu0 0.0
      %1924 = vmatpush1.msra.mxu0 0.0
      %1925 = vmatprep.subr.mxu0 0.0
      %1926 = vmatpush1.msra.mxu0 0.0
      %1927 = vmatprep.subr.mxu0 0.0
      %1928 = vmatpush1.msra.mxu0 0.0
      %1929 = vmatprep.subr.mxu0 0.0
      %1930 = vmatpush1.msra.mxu0 0.0
      %1931 = vmatprep.mubr.f32.mxu0 0.0
      %1932 = vmatmul.mubr.f32.gmra.mrb[0].mxu0 %v354
      %v1933 = vpop.f32.mrb[0].mxu0
      %v1934 = vadd.f32 0.0, %v1933
      %v1935 = vpop.f32.mrb[0].mxu0
      %1936 = vmatprep.mubr.f32.mxu0 0.0
      %1937 = vmatmul.mubr.f32.gmra.mrb[0].mxu0 %v357
      %v1938 = vpop.f32.mrb[0].mxu0
      %v1939 = vadd.f32 0.0, %v1938
      %v1940 = vpop.f32.mrb[0].mxu0
      %1941 = vmatprep.mubr.f32.mxu0 0.0
      %1942 = vmatmul.mubr.f32.gmra.mrb[0].mxu0 %v360
      %v1943 = vpop.f32.mrb[0].mxu0
      %v1944 = vadd.f32 0.0, %v1943
      %v1945 = vpop.f32.mrb[0].mxu0
      %1946 = vmatprep.mubr.f32.mxu0 0.0
      %1947 = vmatmul.mubr.f32.gmra.mrb[0].mxu0 %v363
      %v1948 = vpop.f32.mrb[0].mxu0
      %v1949 = vadd.f32 0.0, %v1948
      %v1950 = vpop.f32.mrb[0].mxu0
      %1951 = vmatprep.mubr.f32.mxu0 0.0
      %1952 = vmatmul.mubr.f32.gmra.mrb[0].mxu0 %v366
      %v1953 = vpop.f32.mrb[0].mxu0
      %v1954 = vadd.f32 0.0, %v1953
      %v1955 = vpop.f32.mrb[0].mxu0
      %1956 = vmatprep.mubr.f32.mxu0 0.0
      %1957 = vmatmul.mubr.f32.gmra.mrb[0].mxu0 %v369
      %v1958 = vpop.f32.mrb[0].mxu0
      %v1959 = vadd.f32 0.0, %v1958
      %v1960 = vpop.f32.mrb[0].mxu0
      %1961 = vmatprep.mubr.f32.mxu0 0.0
      %1962 = vmatmul.mubr.f32.gmra.mrb[0].mxu0 %v372
      %v1963 = vpop.f32.mrb[0].mxu0
      %v1964 = vadd.f32 0.0, %v1963
      %v1965 = vpop.f32.mrb[0].mxu0
      %1966 = vmatprep.mubr.f32.mxu0 0.0
      %1967 = vmatmul.mubr.f32.gmra.mrb[0].mxu0 %v375
      %v1968 = vpop.f32.mrb[0].mxu0
      %v1969 = vadd.f32 0.0, %v1968
      %v1970 = vpop.f32.mrb[0].mxu0
      %1971 = vmatprep.mubr.f32.mxu0 0.0
      %1972 = vmatmul.mubr.f32.gmra.mrb[0].mxu0 %v378
      %v1973 = vpop.f32.mrb[0].mxu0
      %v1974 = vadd.f32 0.0, %v1973
      %v1975 = vpop.f32.mrb[0].mxu0
      %1976 = vmatprep.mubr.f32.mxu0 0.0
      %1977 = vmatmul.mubr.f32.gmra.mrb[0].mxu0 %v381
      %v1978 = vpop.f32.mrb[0].mxu0
      %v1979 = vadd.f32 0.0, %v1978
      %v1980 = vpop.f32.mrb[0].mxu0
      %1981 = vmatprep.mubr.f32.mxu0 0.0
      %1982 = vmatmul.mubr.f32.gmra.mrb[0].mxu0 %v384
      %v1983 = vpop.f32.mrb[0].mxu0
      %v1984 = vadd.f32 0.0, %v1983
      %v1985 = vpop.f32.mrb[0].mxu0
      %1986 = vmatprep.mubr.f32.mxu0 0.0
      %1987 = vmatmul.mubr.f32.gmra.mrb[0].mxu0 %v387
      %v1988 = vpop.f32.mrb[0].mxu0
      %v1989 = vadd.f32 0.0, %v1988
      %v1990 = vpop.f32.mrb[0].mxu0
      %1991 = vmatprep.mubr.f32.mxu0 0.0
      %1992 = vmatmul.mubr.f32.gmra.mrb[0].mxu0 %v390
      %v1993 = vpop.f32.mrb[0].mxu0
      %v1994 = vadd.f32 0.0, %v1993
      %v1995 = vpop.f32.mrb[0].mxu0
      %1996 = vmatprep.mubr.f32.mxu0 0.0
      %1997 = vmatmul.mubr.f32.gmra.mrb[0].mxu0 %v393
      %v1998 = vpop.f32.mrb[0].mxu0
      %v1999 = vadd.f32 0.0, %v1998
      %v2000 = vpop.f32.mrb[0].mxu0
      %2001 = vmatprep.mubr.f32.mxu0 0.0
      %2002 = vmatmul.mubr.f32.gmra.mrb[0].mxu0 %v396
      %v2003 = vpop.f32.mrb[0].mxu0
      %v2004 = vadd.f32 0.0, %v2003
      %v2005 = vpop.f32.mrb[0].mxu0
      %2006 = vmatprep.mubr.f32.mxu0 0.0
      %2007 = vmatmul.mubr.f32.gmra.mrb[0].mxu0 %v399
      %v2008 = vpop.f32.mrb[0].mxu0
      %v2009 = vadd.f32 0.0, %v2008
      %v2010 = vpop.f32.mrb[0].mxu0
      %2011 = vmatprep.mubr.f32.mxu0 0.0
      %2012 = vmatmul.mubr.f32.gmra.mrb[0].mxu0 %v402
      %v2013 = vpop.f32.mrb[0].mxu0
      %v2014 = vadd.f32 0.0, %v2013
      %v2015 = vpop.f32.mrb[0].mxu0
      %2016 = vmatprep.mubr.f32.mxu0 0.0
      %2017 = vmatmul.mubr.f32.gmra.mrb[0].mxu0 %v405
      %v2018 = vpop.f32.mrb[0].mxu0
      %v2019 = vadd.f32 0.0, %v2018
      %v2020 = vpop.f32.mrb[0].mxu0
      %2021 = vmatprep.mubr.f32.mxu0 0.0
      %2022 = vmatmul.mubr.f32.gmra.mrb[0].mxu0 %v408
      %v2023 = vpop.f32.mrb[0].mxu0
      %v2024 = vadd.f32 0.0, %v2023
      %v2025 = vpop.f32.mrb[0].mxu0
      %2026 = vmatprep.mubr.f32.mxu0 0.0
      %2027 = vmatmul.mubr.f32.gmra.mrb[0].mxu0 %v411
      %v2028 = vpop.f32.mrb[0].mxu0
      %v2029 = vadd.f32 0.0, %v2028
      %v2030 = vpop.f32.mrb[0].mxu0
      %2031 = vmatprep.mubr.f32.mxu0 0.0
      %2032 = vmatmul.mubr.f32.gmra.mrb[0].mxu0 %v414
      %v2033 = vpop.f32.mrb[0].mxu0
      %v2034 = vadd.f32 0.0, %v2033
      %v2035 = vpop.f32.mrb[0].mxu0
      %2036 = vmatprep.mubr.f32.mxu0 0.0
      %2037 = vmatmul.mubr.f32.gmra.mrb[0].mxu0 %v417
      %v2038 = vpop.f32.mrb[0].mxu0
      %v2039 = vadd.f32 0.0, %v2038
      %v2040 = vpop.f32.mrb[0].mxu0
      %2041 = vmatprep.mubr.f32.mxu0 0.0
      %2042 = vmatmul.mubr.f32.gmra.mrb[0].mxu0 %v420
      %v2043 = vpop.f32.mrb[0].mxu0
      %v2044 = vadd.f32 0.0, %v2043
      %v2045 = vpop.f32.mrb[0].mxu0
      %2046 = vmatprep.mubr.f32.mxu0 0.0
      %2047 = vmatmul.mubr.f32.gmra.mrb[0].mxu0 %v423
      %v2048 = vpop.f32.mrb[0].mxu0
      %v2049 = vadd.f32 0.0, %v2048
      %v2050 = vpop.f32.mrb[0].mxu0
      %2051 = vmatprep.mubr.f32.mxu0 0.0
      %2052 = vmatmul.mubr.f32.gmra.mrb[0].mxu0 %v426
      %v2053 = vpop.f32.mrb[0].mxu0
      %v2054 = vadd.f32 0.0, %v2053
      %v2055 = vpop.f32.mrb[0].mxu0
      %2056 = vmatprep.mubr.f32.mxu0 0.0
      %2057 = vmatmul.mubr.f32.gmra.mrb[0].mxu0 %v429
      %v2058 = vpop.f32.mrb[0].mxu0
      %v2059 = vadd.f32 0.0, %v2058
      %v2060 = vpop.f32.mrb[0].mxu0
      %2061 = vmatprep.mubr.f32.mxu0 0.0
      %2062 = vmatmul.mubr.f32.gmra.mrb[0].mxu0 %v432
      %v2063 = vpop.f32.mrb[0].mxu0
      %v2064 = vadd.f32 0.0, %v2063
      %v2065 = vpop.f32.mrb[0].mxu0
      %2066 = vmatprep.mubr.f32.mxu0 0.0
      %2067 = vmatmul.mubr.f32.gmra.mrb[0].mxu0 %v435
      %v2068 = vpop.f32.mrb[0].mxu0
      %v2069 = vadd.f32 0.0, %v2068
      %v2070 = vpop.f32.mrb[0].mxu0
      %2071 = vmatprep.mubr.f32.mxu0 0.0
      %2072 = vmatmul.mubr.f32.gmra.mrb[0].mxu0 %v438
      %v2073 = vpop.f32.mrb[0].mxu0
      %v2074 = vadd.f32 0.0, %v2073
      %v2075 = vpop.f32.mrb[0].mxu0
      %2076 = vmatprep.mubr.f32.mxu0 0.0
      %2077 = vmatmul.mubr.f32.gmra.mrb[0].mxu0 %v441
      %v2078 = vpop.f32.mrb[0].mxu0
      %v2079 = vadd.f32 0.0, %v2078
      %v2080 = vpop.f32.mrb[0].mxu0
      %2081 = vmatprep.mubr.f32.mxu0 0.0
      %2082 = vmatmul.mubr.f32.gmra.mrb[0].mxu0 %v444
      %v2083 = vpop.f32.mrb[0].mxu0
      %v2084 = vadd.f32 0.0, %v2083
      %v2085 = vpop.f32.mrb[0].mxu0
      %2086 = vmatprep.mubr.f32.mxu0 0.0
      %2087 = vmatmul.mubr.f32.gmra.mrb[0].mxu0 %v447
      %v2088 = vpop.f32.mrb[0].mxu0
      %v2089 = vadd.f32 0.0, %v2088
      %v2090 = vpop.f32.mrb[0].mxu0
      %2091 = vdwg.mxu0
      %v2093 = vsel %vm678, %v1934, 0
      %v2096 = vsel %vm678, %v1939, 0
      %v2099 = vsel %vm678, %v1944, 0
      %v2102 = vsel %vm678, %v1949, 0
      %v2105 = vsel %vm678, %v1954, 0
      %v2108 = vsel %vm678, %v1959, 0
      %v2111 = vsel %vm678, %v1964, 0
      %v2114 = vsel %vm678, %v1969, 0
      %v2117 = vsel %vm678, %v1974, 0
      %v2120 = vsel %vm678, %v1979, 0
      %v2123 = vsel %vm678, %v1984, 0
      %v2126 = vsel %vm678, %v1989, 0
      %v2129 = vsel %vm678, %v1994, 0
      %v2132 = vsel %vm678, %v1999, 0
      %v2135 = vsel %vm678, %v2004, 0
      %v2138 = vsel %vm678, %v2009, 0
      %v2141 = vsel %vm678, %v2014, 0
      %v2144 = vsel %vm678, %v2019, 0
      %v2147 = vsel %vm678, %v2024, 0
      %v2150 = vsel %vm678, %v2029, 0
      %v2153 = vsel %vm678, %v2034, 0
      %v2156 = vsel %vm678, %v2039, 0
      %v2159 = vsel %vm678, %v2044, 0
      %v2162 = vsel %vm678, %v2049, 0
      %v2165 = vsel %vm678, %v2054, 0
      %v2168 = vsel %vm678, %v2059, 0
      %v2171 = vsel %vm678, %v2064, 0
      %v2174 = vsel %vm678, %v2069, 0
      %v2177 = vsel %vm678, %v2074, 0
      %v2180 = vsel %vm678, %v2079, 0
      %v2183 = vsel %vm678, %v2084, 0
      %v2186 = vsel %vm678, %v2089, 0
      %2188 = vmatprep.subr.mxu0 %v305
      %2189 = vmatpush1.msra.mxu0 %v304
      %2190 = vmatprep.subr.mxu0 %v307
      %2191 = vmatpush1.msra.mxu0 %v306
      %2192 = vmatprep.subr.mxu0 %v309
      %2193 = vmatpush1.msra.mxu0 %v308
      %2194 = vmatprep.subr.mxu0 %v311
      %2195 = vmatpush1.msra.mxu0 %v310
      %2196 = vmatprep.subr.mxu0 %v313
      %2197 = vmatpush1.msra.mxu0 %v312
      %2198 = vmatprep.subr.mxu0 %v315
      %2199 = vmatpush1.msra.mxu0 %v314
      %2200 = vmatprep.subr.mxu0 %v317
      %2201 = vmatpush1.msra.mxu0 %v316
      %2202 = vmatprep.subr.mxu0 %v319
      %2203 = vmatpush1.msra.mxu0 %v318
      %2204 = vmatprep.subr.mxu0 %v321
      %2205 = vmatpush1.msra.mxu0 %v320
      %2206 = vmatprep.subr.mxu0 %v323
      %2207 = vmatpush1.msra.mxu0 %v322
      %2208 = vmatprep.subr.mxu0 %v325
      %2209 = vmatpush1.msra.mxu0 %v324
      %2210 = vmatprep.subr.mxu0 %v780
      %2211 = vmatpush1.msra.mxu0 %v777
      %2212 = vmatprep.subr.mxu0 0.0
      %2213 = vmatpush1.msra.mxu0 0.0
      %2214 = vmatprep.subr.mxu0 0.0
      %2215 = vmatpush1.msra.mxu0 0.0
      %2216 = vmatprep.subr.mxu0 0.0
      %2217 = vmatpush1.msra.mxu0 0.0
      %2218 = vmatprep.subr.mxu0 0.0
      %2219 = vmatpush1.msra.mxu0 0.0
      %2220 = vmatprep.subr.mxu0 0.0
      %2221 = vmatpush1.msra.mxu0 0.0
      %2222 = vmatprep.subr.mxu0 0.0
      %2223 = vmatpush1.msra.mxu0 0.0
      %2224 = vmatprep.subr.mxu0 0.0
      %2225 = vmatpush1.msra.mxu0 0.0
      %2226 = vmatprep.subr.mxu0 0.0
      %2227 = vmatpush1.msra.mxu0 0.0
      %2228 = vmatprep.subr.mxu0 0.0
      %2229 = vmatpush1.msra.mxu0 0.0
      %2230 = vmatprep.subr.mxu0 0.0
      %2231 = vmatpush1.msra.mxu0 0.0
      %2232 = vmatprep.subr.mxu0 0.0
      %2233 = vmatpush1.msra.mxu0 0.0
      %2234 = vmatprep.subr.mxu0 0.0
      %2235 = vmatpush1.msra.mxu0 0.0
      %2236 = vmatprep.subr.mxu0 0.0
      %2237 = vmatpush1.msra.mxu0 0.0
      %2238 = vmatprep.subr.mxu0 0.0
      %2239 = vmatpush1.msra.mxu0 0.0
      %2240 = vmatprep.subr.mxu0 0.0
      %2241 = vmatpush1.msra.mxu0 0.0
      %2242 = vmatprep.subr.mxu0 0.0
      %2243 = vmatpush1.msra.mxu0 0.0
      %2244 = vmatprep.subr.mxu0 0.0
      %2245 = vmatpush1.msra.mxu0 0.0
      %2246 = vmatprep.subr.mxu0 0.0
      %2247 = vmatpush1.msra.mxu0 0.0
      %2248 = vmatprep.subr.mxu0 0.0
      %2249 = vmatpush1.msra.mxu0 0.0
      %2250 = vmatprep.subr.mxu0 0.0
      %2251 = vmatpush1.msra.mxu0 0.0
      %2252 = vmatprep.mubr.f32.mxu0 0.0
      %2253 = vmatmul.mubr.f32.gmra.mrb[0].mxu0 %v2093
      %v2254 = vpop.f32.mrb[0].mxu0
      %v2255 = vadd.f32 0.0, %v2254
      %v2256 = vpop.f32.mrb[0].mxu0
      %v2257 = vadd.f32 0.0, %v2256
      %2258 = vmatprep.mubr.f32.mxu0 0.0
      %2259 = vmatmul.mubr.f32.gmra.mrb[0].mxu0 %v2096
      %v2260 = vpop.f32.mrb[0].mxu0
      %v2261 = vadd.f32 0.0, %v2260
      %v2262 = vpop.f32.mrb[0].mxu0
      %v2263 = vadd.f32 0.0, %v2262
      %2264 = vmatprep.mubr.f32.mxu0 0.0
      %2265 = vmatmul.mubr.f32.gmra.mrb[0].mxu0 %v2099
      %v2266 = vpop.f32.mrb[0].mxu0
      %v2267 = vadd.f32 0.0, %v2266
      %v2268 = vpop.f32.mrb[0].mxu0
      %v2269 = vadd.f32 0.0, %v2268
      %2270 = vmatprep.mubr.f32.mxu0 0.0
      %2271 = vmatmul.mubr.f32.gmra.mrb[0].mxu0 %v2102
      %v2272 = vpop.f32.mrb[0].mxu0
      %v2273 = vadd.f32 0.0, %v2272
      %v2274 = vpop.f32.mrb[0].mxu0
      %v2275 = vadd.f32 0.0, %v2274
      %2276 = vmatprep.mubr.f32.mxu0 0.0
      %2277 = vmatmul.mubr.f32.gmra.mrb[0].mxu0 %v2105
      %v2278 = vpop.f32.mrb[0].mxu0
      %v2279 = vadd.f32 0.0, %v2278
      %v2280 = vpop.f32.mrb[0].mxu0
      %v2281 = vadd.f32 0.0, %v2280
      %2282 = vmatprep.mubr.f32.mxu0 0.0
      %2283 = vmatmul.mubr.f32.gmra.mrb[0].mxu0 %v2108
      %v2284 = vpop.f32.mrb[0].mxu0
      %v2285 = vadd.f32 0.0, %v2284
      %v2286 = vpop.f32.mrb[0].mxu0
      %v2287 = vadd.f32 0.0, %v2286
      %2288 = vmatprep.mubr.f32.mxu0 0.0
      %2289 = vmatmul.mubr.f32.gmra.mrb[0].mxu0 %v2111
      %v2290 = vpop.f32.mrb[0].mxu0
      %v2291 = vadd.f32 0.0, %v2290
      %v2292 = vpop.f32.mrb[0].mxu0
      %v2293 = vadd.f32 0.0, %v2292
      %2294 = vmatprep.mubr.f32.mxu0 0.0
      %2295 = vmatmul.mubr.f32.gmra.mrb[0].mxu0 %v2114
      %v2296 = vpop.f32.mrb[0].mxu0
      %v2297 = vadd.f32 0.0, %v2296
      %v2298 = vpop.f32.mrb[0].mxu0
      %v2299 = vadd.f32 0.0, %v2298
      %2300 = vmatprep.mubr.f32.mxu0 0.0
      %2301 = vmatmul.mubr.f32.gmra.mrb[0].mxu0 %v2117
      %v2302 = vpop.f32.mrb[0].mxu0
      %v2303 = vadd.f32 0.0, %v2302
      %v2304 = vpop.f32.mrb[0].mxu0
      %v2305 = vadd.f32 0.0, %v2304
      %2306 = vmatprep.mubr.f32.mxu0 0.0
      %2307 = vmatmul.mubr.f32.gmra.mrb[0].mxu0 %v2120
      %v2308 = vpop.f32.mrb[0].mxu0
      %v2309 = vadd.f32 0.0, %v2308
      %v2310 = vpop.f32.mrb[0].mxu0
      %v2311 = vadd.f32 0.0, %v2310
      %2312 = vmatprep.mubr.f32.mxu0 0.0
      %2313 = vmatmul.mubr.f32.gmra.mrb[0].mxu0 %v2123
      %v2314 = vpop.f32.mrb[0].mxu0
      %v2315 = vadd.f32 0.0, %v2314
      %v2316 = vpop.f32.mrb[0].mxu0
      %v2317 = vadd.f32 0.0, %v2316
      %2318 = vmatprep.mubr.f32.mxu0 0.0
      %2319 = vmatmul.mubr.f32.gmra.mrb[0].mxu0 %v2126
      %v2320 = vpop.f32.mrb[0].mxu0
      %v2321 = vadd.f32 0.0, %v2320
      %v2322 = vpop.f32.mrb[0].mxu0
      %v2323 = vadd.f32 0.0, %v2322
      %2324 = vmatprep.mubr.f32.mxu0 0.0
      %2325 = vmatmul.mubr.f32.gmra.mrb[0].mxu0 %v2129
      %v2326 = vpop.f32.mrb[0].mxu0
      %v2327 = vadd.f32 0.0, %v2326
      %v2328 = vpop.f32.mrb[0].mxu0
      %v2329 = vadd.f32 0.0, %v2328
      %2330 = vmatprep.mubr.f32.mxu0 0.0
      %2331 = vmatmul.mubr.f32.gmra.mrb[0].mxu0 %v2132
      %v2332 = vpop.f32.mrb[0].mxu0
      %v2333 = vadd.f32 0.0, %v2332
      %v2334 = vpop.f32.mrb[0].mxu0
      %v2335 = vadd.f32 0.0, %v2334
      %2336 = vmatprep.mubr.f32.mxu0 0.0
      %2337 = vmatmul.mubr.f32.gmra.mrb[0].mxu0 %v2135
      %v2338 = vpop.f32.mrb[0].mxu0
      %v2339 = vadd.f32 0.0, %v2338
      %v2340 = vpop.f32.mrb[0].mxu0
      %v2341 = vadd.f32 0.0, %v2340
      %2342 = vmatprep.mubr.f32.mxu0 0.0
      %2343 = vmatmul.mubr.f32.gmra.mrb[0].mxu0 %v2138
      %v2344 = vpop.f32.mrb[0].mxu0
      %v2345 = vadd.f32 0.0, %v2344
      %v2346 = vpop.f32.mrb[0].mxu0
      %v2347 = vadd.f32 0.0, %v2346
      %2348 = vmatprep.mubr.f32.mxu0 0.0
      %2349 = vmatmul.mubr.f32.gmra.mrb[0].mxu0 %v2141
      %v2350 = vpop.f32.mrb[0].mxu0
      %v2351 = vadd.f32 0.0, %v2350
      %v2352 = vpop.f32.mrb[0].mxu0
      %v2353 = vadd.f32 0.0, %v2352
      %2354 = vmatprep.mubr.f32.mxu0 0.0
      %2355 = vmatmul.mubr.f32.gmra.mrb[0].mxu0 %v2144
      %v2356 = vpop.f32.mrb[0].mxu0
      %v2357 = vadd.f32 0.0, %v2356
      %v2358 = vpop.f32.mrb[0].mxu0
      %v2359 = vadd.f32 0.0, %v2358
      %2360 = vmatprep.mubr.f32.mxu0 0.0
      %2361 = vmatmul.mubr.f32.gmra.mrb[0].mxu0 %v2147
      %v2362 = vpop.f32.mrb[0].mxu0
      %v2363 = vadd.f32 0.0, %v2362
      %v2364 = vpop.f32.mrb[0].mxu0
      %v2365 = vadd.f32 0.0, %v2364
      %2366 = vmatprep.mubr.f32.mxu0 0.0
      %2367 = vmatmul.mubr.f32.gmra.mrb[0].mxu0 %v2150
      %v2368 = vpop.f32.mrb[0].mxu0
      %v2369 = vadd.f32 0.0, %v2368
      %v2370 = vpop.f32.mrb[0].mxu0
      %v2371 = vadd.f32 0.0, %v2370
      %2372 = vmatprep.mubr.f32.mxu0 0.0
      %2373 = vmatmul.mubr.f32.gmra.mrb[0].mxu0 %v2153
      %v2374 = vpop.f32.mrb[0].mxu0
      %v2375 = vadd.f32 0.0, %v2374
      %v2376 = vpop.f32.mrb[0].mxu0
      %v2377 = vadd.f32 0.0, %v2376
      %2378 = vmatprep.mubr.f32.mxu0 0.0
      %2379 = vmatmul.mubr.f32.gmra.mrb[0].mxu0 %v2156
      %v2380 = vpop.f32.mrb[0].mxu0
      %v2381 = vadd.f32 0.0, %v2380
      %v2382 = vpop.f32.mrb[0].mxu0
      %v2383 = vadd.f32 0.0, %v2382
      %2384 = vmatprep.mubr.f32.mxu0 0.0
      %2385 = vmatmul.mubr.f32.gmra.mrb[0].mxu0 %v2159
      %v2386 = vpop.f32.mrb[0].mxu0
      %v2387 = vadd.f32 0.0, %v2386
      %v2388 = vpop.f32.mrb[0].mxu0
      %v2389 = vadd.f32 0.0, %v2388
      %2390 = vmatprep.mubr.f32.mxu0 0.0
      %2391 = vmatmul.mubr.f32.gmra.mrb[0].mxu0 %v2162
      %v2392 = vpop.f32.mrb[0].mxu0
      %v2393 = vadd.f32 0.0, %v2392
      %v2394 = vpop.f32.mrb[0].mxu0
      %v2395 = vadd.f32 0.0, %v2394
      %2396 = vmatprep.mubr.f32.mxu0 0.0
      %2397 = vmatmul.mubr.f32.gmra.mrb[0].mxu0 %v2165
      %v2398 = vpop.f32.mrb[0].mxu0
      %v2399 = vadd.f32 0.0, %v2398
      %v2400 = vpop.f32.mrb[0].mxu0
      %v2401 = vadd.f32 0.0, %v2400
      %2402 = vmatprep.mubr.f32.mxu0 0.0
      %2403 = vmatmul.mubr.f32.gmra.mrb[0].mxu0 %v2168
      %v2404 = vpop.f32.mrb[0].mxu0
      %v2405 = vadd.f32 0.0, %v2404
      %v2406 = vpop.f32.mrb[0].mxu0
      %v2407 = vadd.f32 0.0, %v2406
      %2408 = vmatprep.mubr.f32.mxu0 0.0
      %2409 = vmatmul.mubr.f32.gmra.mrb[0].mxu0 %v2171
      %v2410 = vpop.f32.mrb[0].mxu0
      %v2411 = vadd.f32 0.0, %v2410
      %v2412 = vpop.f32.mrb[0].mxu0
      %v2413 = vadd.f32 0.0, %v2412
      %2414 = vmatprep.mubr.f32.mxu0 0.0
      %2415 = vmatmul.mubr.f32.gmra.mrb[0].mxu0 %v2174
      %v2416 = vpop.f32.mrb[0].mxu0
      %v2417 = vadd.f32 0.0, %v2416
      %v2418 = vpop.f32.mrb[0].mxu0
      %v2419 = vadd.f32 0.0, %v2418
      %2420 = vmatprep.mubr.f32.mxu0 0.0
      %2421 = vmatmul.mubr.f32.gmra.mrb[0].mxu0 %v2177
      %v2422 = vpop.f32.mrb[0].mxu0
      %v2423 = vadd.f32 0.0, %v2422
      %v2424 = vpop.f32.mrb[0].mxu0
      %v2425 = vadd.f32 0.0, %v2424
      %2426 = vmatprep.mubr.f32.mxu0 0.0
      %2427 = vmatmul.mubr.f32.gmra.mrb[0].mxu0 %v2180
      %v2428 = vpop.f32.mrb[0].mxu0
      %v2429 = vadd.f32 0.0, %v2428
      %v2430 = vpop.f32.mrb[0].mxu0
      %v2431 = vadd.f32 0.0, %v2430
      %2432 = vmatprep.mubr.f32.mxu0 0.0
      %2433 = vmatmul.mubr.f32.gmra.mrb[0].mxu0 %v2183
      %v2434 = vpop.f32.mrb[0].mxu0
      %v2435 = vadd.f32 0.0, %v2434
      %v2436 = vpop.f32.mrb[0].mxu0
      %v2437 = vadd.f32 0.0, %v2436
      %2438 = vmatprep.mubr.f32.mxu0 0.0
      %2439 = vmatmul.mubr.f32.gmra.mrb[0].mxu0 %v2186
      %v2440 = vpop.f32.mrb[0].mxu0
      %v2441 = vadd.f32 0.0, %v2440
      %v2442 = vpop.f32.mrb[0].mxu0
      %v2443 = vadd.f32 0.0, %v2442
      %2444 = vdwg.mxu0
      %v2445 = vand.u32 2147483647, %v2255
      %v2446 = vand.u32 2147483647, %v2257
      %v2447 = vand.u32 2147483647, %v2261
      %v2448 = vand.u32 2147483647, %v2263
      %v2449 = vand.u32 2147483647, %v2267
      %v2450 = vand.u32 2147483647, %v2269
      %v2451 = vand.u32 2147483647, %v2273
      %v2452 = vand.u32 2147483647, %v2275
      %v2453 = vand.u32 2147483647, %v2279
      %v2454 = vand.u32 2147483647, %v2281
      %v2455 = vand.u32 2147483647, %v2285
      %v2456 = vand.u32 2147483647, %v2287
      %v2457 = vand.u32 2147483647, %v2291
      %v2458 = vand.u32 2147483647, %v2293
      %v2459 = vand.u32 2147483647, %v2297
      %v2460 = vand.u32 2147483647, %v2299
      %v2461 = vand.u32 2147483647, %v2303
      %v2462 = vand.u32 2147483647, %v2305
      %v2463 = vand.u32 2147483647, %v2309
      %v2464 = vand.u32 2147483647, %v2311
      %v2465 = vand.u32 2147483647, %v2315
      %v2466 = vand.u32 2147483647, %v2317
      %v2467 = vand.u32 2147483647, %v2321
      %v2468 = vand.u32 2147483647, %v2323
      %v2469 = vand.u32 2147483647, %v2327
      %v2470 = vand.u32 2147483647, %v2329
      %v2471 = vand.u32 2147483647, %v2333
      %v2472 = vand.u32 2147483647, %v2335
      %v2473 = vand.u32 2147483647, %v2339
      %v2474 = vand.u32 2147483647, %v2341
      %v2475 = vand.u32 2147483647, %v2345
      %v2476 = vand.u32 2147483647, %v2347
      %v2477 = vand.u32 2147483647, %v2351
      %v2478 = vand.u32 2147483647, %v2353
      %v2479 = vand.u32 2147483647, %v2357
      %v2480 = vand.u32 2147483647, %v2359
      %v2481 = vand.u32 2147483647, %v2363
      %v2482 = vand.u32 2147483647, %v2365
      %v2483 = vand.u32 2147483647, %v2369
      %v2484 = vand.u32 2147483647, %v2371
      %v2485 = vand.u32 2147483647, %v2375
      %v2486 = vand.u32 2147483647, %v2377
      %v2487 = vand.u32 2147483647, %v2381
      %v2488 = vand.u32 2147483647, %v2383
      %v2489 = vand.u32 2147483647, %v2387
      %v2490 = vand.u32 2147483647, %v2389
      %v2491 = vand.u32 2147483647, %v2393
      %v2492 = vand.u32 2147483647, %v2395
      %v2493 = vand.u32 2147483647, %v2399
      %v2494 = vand.u32 2147483647, %v2401
      %v2495 = vand.u32 2147483647, %v2405
      %v2496 = vand.u32 2147483647, %v2407
      %v2497 = vand.u32 2147483647, %v2411
      %v2498 = vand.u32 2147483647, %v2413
      %v2499 = vand.u32 2147483647, %v2417
      %v2500 = vand.u32 2147483647, %v2419
      %v2501 = vand.u32 2147483647, %v2423
      %v2502 = vand.u32 2147483647, %v2425
      %v2503 = vand.u32 2147483647, %v2429
      %v2504 = vand.u32 2147483647, %v2431
      %v2505 = vand.u32 2147483647, %v2435
      %v2506 = vand.u32 2147483647, %v2437
      %v2507 = vand.u32 2147483647, %v2441
      %v2508 = vand.u32 2147483647, %v2443
      %v2509 = vadd.f32 %v1774, %v2445
      %v2510 = vadd.f32 %v1775, %v2446
      %v2511 = vadd.f32 %v1776, %v2447
      %v2512 = vadd.f32 %v1777, %v2448
      %v2513 = vadd.f32 %v1778, %v2449
      %v2514 = vadd.f32 %v1779, %v2450
      %v2515 = vadd.f32 %v1780, %v2451
      %v2516 = vadd.f32 %v1781, %v2452
      %v2517 = vadd.f32 %v1782, %v2453
      %v2518 = vadd.f32 %v1783, %v2454
      %v2519 = vadd.f32 %v1784, %v2455
      %v2520 = vadd.f32 %v1785, %v2456
      %v2521 = vadd.f32 %v1786, %v2457
      %v2522 = vadd.f32 %v1787, %v2458
      %v2523 = vadd.f32 %v1788, %v2459
      %v2524 = vadd.f32 %v1789, %v2460
      %v2525 = vadd.f32 %v1790, %v2461
      %v2526 = vadd.f32 %v1791, %v2462
      %v2527 = vadd.f32 %v1792, %v2463
      %v2528 = vadd.f32 %v1793, %v2464
      %v2529 = vadd.f32 %v1794, %v2465
      %v2530 = vadd.f32 %v1795, %v2466
      %v2531 = vadd.f32 %v1796, %v2467
      %v2532 = vadd.f32 %v1797, %v2468
      %v2533 = vadd.f32 %v1798, %v2469
      %v2534 = vadd.f32 %v1799, %v2470
      %v2535 = vadd.f32 %v1800, %v2471
      %v2536 = vadd.f32 %v1801, %v2472
      %v2537 = vadd.f32 %v1802, %v2473
      %v2538 = vadd.f32 %v1803, %v2474
      %v2539 = vadd.f32 %v1804, %v2475
      %v2540 = vadd.f32 %v1805, %v2476
      %v2541 = vadd.f32 %v1806, %v2477
      %v2542 = vadd.f32 %v1807, %v2478
      %v2543 = vadd.f32 %v1808, %v2479
      %v2544 = vadd.f32 %v1809, %v2480
      %v2545 = vadd.f32 %v1810, %v2481
      %v2546 = vadd.f32 %v1811, %v2482
      %v2547 = vadd.f32 %v1812, %v2483
      %v2548 = vadd.f32 %v1813, %v2484
      %v2549 = vadd.f32 %v1814, %v2485
      %v2550 = vadd.f32 %v1815, %v2486
      %v2551 = vadd.f32 %v1816, %v2487
      %v2552 = vadd.f32 %v1817, %v2488
      %v2553 = vadd.f32 %v1818, %v2489
      %v2554 = vadd.f32 %v1819, %v2490
      %v2555 = vadd.f32 %v1820, %v2491
      %v2556 = vadd.f32 %v1821, %v2492
      %v2557 = vadd.f32 %v1822, %v2493
      %v2558 = vadd.f32 %v1823, %v2494
      %v2559 = vadd.f32 %v1824, %v2495
      %v2560 = vadd.f32 %v1825, %v2496
      %v2561 = vadd.f32 %v1826, %v2497
      %v2562 = vadd.f32 %v1827, %v2498
      %v2563 = vadd.f32 %v1828, %v2499
      %v2564 = vadd.f32 %v1829, %v2500
      %v2565 = vadd.f32 %v1830, %v2501
      %v2566 = vadd.f32 %v1831, %v2502
      %v2567 = vadd.f32 %v1832, %v2503
      %v2568 = vadd.f32 %v1833, %v2504
      %v2569 = vadd.f32 %v1834, %v2505
      %v2570 = vadd.f32 %v1835, %v2506
      %v2571 = vadd.f32 %v1836, %v2507
      %v2572 = vadd.f32 %v1837, %v2508
      %v2573 = vmul.f32 %v2509, 0.33333334
      %v2574 = vmul.f32 %v2510, 0.33333334
      %v2575 = vmul.f32 %v2511, 0.33333334
      %v2576 = vmul.f32 %v2512, 0.33333334
      %v2577 = vmul.f32 %v2513, 0.33333334
      %v2578 = vmul.f32 %v2514, 0.33333334
      %v2579 = vmul.f32 %v2515, 0.33333334
      %v2580 = vmul.f32 %v2516, 0.33333334
      %v2581 = vmul.f32 %v2517, 0.33333334
      %v2582 = vmul.f32 %v2518, 0.33333334
      %v2583 = vmul.f32 %v2519, 0.33333334
      %v2584 = vmul.f32 %v2520, 0.33333334
      %v2585 = vmul.f32 %v2521, 0.33333334
      %v2586 = vmul.f32 %v2522, 0.33333334
      %v2587 = vmul.f32 %v2523, 0.33333334
      %v2588 = vmul.f32 %v2524, 0.33333334
      %v2589 = vmul.f32 %v2525, 0.33333334
      %v2590 = vmul.f32 %v2526, 0.33333334
      %v2591 = vmul.f32 %v2527, 0.33333334
      %v2592 = vmul.f32 %v2528, 0.33333334
      %v2593 = vmul.f32 %v2529, 0.33333334
      %v2594 = vmul.f32 %v2530, 0.33333334
      %v2595 = vmul.f32 %v2531, 0.33333334
      %v2596 = vmul.f32 %v2532, 0.33333334
      %v2597 = vmul.f32 %v2533, 0.33333334
      %v2598 = vmul.f32 %v2534, 0.33333334
      %v2599 = vmul.f32 %v2535, 0.33333334
      %v2600 = vmul.f32 %v2536, 0.33333334
      %v2601 = vmul.f32 %v2537, 0.33333334
      %v2602 = vmul.f32 %v2538, 0.33333334
      %v2603 = vmul.f32 %v2539, 0.33333334
      %v2604 = vmul.f32 %v2540, 0.33333334
      %v2605 = vmul.f32 %v2541, 0.33333334
      %v2606 = vmul.f32 %v2542, 0.33333334
      %v2607 = vmul.f32 %v2543, 0.33333334
      %v2608 = vmul.f32 %v2544, 0.33333334
      %v2609 = vmul.f32 %v2545, 0.33333334
      %v2610 = vmul.f32 %v2546, 0.33333334
      %v2611 = vmul.f32 %v2547, 0.33333334
      %v2612 = vmul.f32 %v2548, 0.33333334
      %v2613 = vmul.f32 %v2549, 0.33333334
      %v2614 = vmul.f32 %v2550, 0.33333334
      %v2615 = vmul.f32 %v2551, 0.33333334
      %v2616 = vmul.f32 %v2552, 0.33333334
      %v2617 = vmul.f32 %v2553, 0.33333334
      %v2618 = vmul.f32 %v2554, 0.33333334
      %v2619 = vmul.f32 %v2555, 0.33333334
      %v2620 = vmul.f32 %v2556, 0.33333334
      %v2621 = vmul.f32 %v2557, 0.33333334
      %v2622 = vmul.f32 %v2558, 0.33333334
      %v2623 = vmul.f32 %v2559, 0.33333334
      %v2624 = vmul.f32 %v2560, 0.33333334
      %v2625 = vmul.f32 %v2561, 0.33333334
      %v2626 = vmul.f32 %v2562, 0.33333334
      %v2627 = vmul.f32 %v2563, 0.33333334
      %v2628 = vmul.f32 %v2564, 0.33333334
      %v2629 = vmul.f32 %v2565, 0.33333334
      %v2630 = vmul.f32 %v2566, 0.33333334
      %v2631 = vmul.f32 %v2567, 0.33333334
      %v2632 = vmul.f32 %v2568, 0.33333334
      %v2633 = vmul.f32 %v2569, 0.33333334
      %v2634 = vmul.f32 %v2570, 0.33333334
      %v2635 = vmul.f32 %v2571, 0.33333334
      %v2636 = vmul.f32 %v2572, 0.33333334
      %v2637 = vld [vmem:[%s4] sm:$0xff]
      %v2638 = vld [vmem:[%s4 + $0x8] sm:$0xff]
      %v2639 = vld [vmem:[%s4 + $0x10] sm:$0xff]
      %v2640 = vld [vmem:[%s4 + $0x18] sm:$0xff]
      %v2641 = vld [vmem:[%s4 + $0x20] sm:$0xff]
      %v2642 = vld [vmem:[%s4 + $0x28] sm:$0xff]
      %v2643 = vld [vmem:[%s4 + $0x30] sm:$0xff]
      %v2644 = vld [vmem:[%s4 + $0x38] sm:$0xff]
      %v2645 = vld [vmem:[%s4 + $0x40] sm:$0xff]
      %v2646 = vld [vmem:[%s4 + $0x48] sm:$0xff]
      %v2647 = vld [vmem:[%s4 + $0x50] sm:$0xff]
      %v2648 = vld [vmem:[%s4 + $0x58] sm:$0xff]
      %v2649 = vld [vmem:[%s4 + $0x60] sm:$0xff]
      %v2650 = vld [vmem:[%s4 + $0x68] sm:$0xff]
      %v2651 = vld [vmem:[%s4 + $0x70] sm:$0xf]
      %v2652 = vld [vmem:[%s4 + $0x78] sm:$0xf]
      %2653 = vmatprep.subr.mxu0 %v2574
      %2654 = vmatpush1.msra.mxu0 %v2573
      %2655 = vmatprep.subr.mxu0 %v2576
      %2656 = vmatpush1.msra.mxu0 %v2575
      %2657 = vmatprep.subr.mxu0 %v2578
      %2658 = vmatpush1.msra.mxu0 %v2577
      %2659 = vmatprep.subr.mxu0 %v2580
      %2660 = vmatpush1.msra.mxu0 %v2579
      %2661 = vmatprep.subr.mxu0 %v2582
      %2662 = vmatpush1.msra.mxu0 %v2581
      %2663 = vmatprep.subr.mxu0 %v2584
      %2664 = vmatpush1.msra.mxu0 %v2583
      %2665 = vmatprep.subr.mxu0 %v2586
      %2666 = vmatpush1.msra.mxu0 %v2585
      %2667 = vmatprep.subr.mxu0 %v2588
      %2668 = vmatpush1.msra.mxu0 %v2587
      %2669 = vmatprep.subr.mxu0 %v2590
      %2670 = vmatpush1.msra.mxu0 %v2589
      %2671 = vmatprep.subr.mxu0 %v2592
      %2672 = vmatpush1.msra.mxu0 %v2591
      %2673 = vmatprep.subr.mxu0 %v2594
      %2674 = vmatpush1.msra.mxu0 %v2593
      %2675 = vmatprep.subr.mxu0 %v2596
      %2676 = vmatpush1.msra.mxu0 %v2595
      %2677 = vmatprep.subr.mxu0 %v2598
      %2678 = vmatpush1.msra.mxu0 %v2597
      %2679 = vmatprep.subr.mxu0 %v2600
      %2680 = vmatpush1.msra.mxu0 %v2599
      %2681 = vmatprep.subr.mxu0 %v2602
      %2682 = vmatpush1.msra.mxu0 %v2601
      %2683 = vmatprep.subr.mxu0 %v2604
      %2684 = vmatpush1.msra.mxu0 %v2603
      %2685 = vmatprep.subr.mxu0 %v2606
      %2686 = vmatpush1.msra.mxu0 %v2605
      %2687 = vmatprep.subr.mxu0 %v2608
      %2688 = vmatpush1.msra.mxu0 %v2607
      %2689 = vmatprep.subr.mxu0 %v2610
      %2690 = vmatpush1.msra.mxu0 %v2609
      %2691 = vmatprep.subr.mxu0 %v2612
      %2692 = vmatpush1.msra.mxu0 %v2611
      %2693 = vmatprep.subr.mxu0 %v2614
      %2694 = vmatpush1.msra.mxu0 %v2613
      %2695 = vmatprep.subr.mxu0 %v2616
      %2696 = vmatpush1.msra.mxu0 %v2615
      %2697 = vmatprep.subr.mxu0 %v2618
      %2698 = vmatpush1.msra.mxu0 %v2617
      %2699 = vmatprep.subr.mxu0 %v2620
      %2700 = vmatpush1.msra.mxu0 %v2619
      %2701 = vmatprep.subr.mxu0 %v2622
      %2702 = vmatpush1.msra.mxu0 %v2621
      %2703 = vmatprep.subr.mxu0 %v2624
      %2704 = vmatpush1.msra.mxu0 %v2623
      %2705 = vmatprep.subr.mxu0 %v2626
      %2706 = vmatpush1.msra.mxu0 %v2625
      %2707 = vmatprep.subr.mxu0 %v2628
      %2708 = vmatpush1.msra.mxu0 %v2627
      %2709 = vmatprep.subr.mxu0 %v2630
      %2710 = vmatpush1.msra.mxu0 %v2629
      %2711 = vmatprep.subr.mxu0 %v2632
      %2712 = vmatpush1.msra.mxu0 %v2631
      %2713 = vmatprep.subr.mxu0 %v2634
      %2714 = vmatpush1.msra.mxu0 %v2633
      %2715 = vmatprep.subr.mxu0 %v2636
      %2716 = vmatpush1.msra.mxu0 %v2635
      %2717 = vmatprep.mubr.f32.mxu0 %v2638
      %2718 = vmatmul.mubr.f32.gmra.mrb[0].mxu0 %v2637
      %v2719 = vpop.f32.mrb[0].mxu0
      %v2720 = vadd.f32 0.0, %v2719
      %v2721 = vpop.f32.mrb[0].mxu0
      %v2722 = vadd.f32 0.0, %v2721
      %2723 = vmatprep.mubr.f32.mxu0 %v2640
      %2724 = vmatmul.mubr.f32.gmra.mrb[0].mxu0 %v2639
      %v2725 = vpop.f32.mrb[0].mxu0
      %v2726 = vadd.f32 0.0, %v2725
      %v2727 = vpop.f32.mrb[0].mxu0
      %v2728 = vadd.f32 0.0, %v2727
      %2729 = vmatprep.mubr.f32.mxu0 %v2642
      %2730 = vmatmul.mubr.f32.gmra.mrb[0].mxu0 %v2641
      %v2731 = vpop.f32.mrb[0].mxu0
      %v2732 = vadd.f32 0.0, %v2731
      %v2733 = vpop.f32.mrb[0].mxu0
      %v2734 = vadd.f32 0.0, %v2733
      %2735 = vmatprep.mubr.f32.mxu0 %v2644
      %2736 = vmatmul.mubr.f32.gmra.mrb[0].mxu0 %v2643
      %v2737 = vpop.f32.mrb[0].mxu0
      %v2738 = vadd.f32 0.0, %v2737
      %v2739 = vpop.f32.mrb[0].mxu0
      %v2740 = vadd.f32 0.0, %v2739
      %2741 = vmatprep.mubr.f32.mxu0 %v2646
      %2742 = vmatmul.mubr.f32.gmra.mrb[0].mxu0 %v2645
      %v2743 = vpop.f32.mrb[0].mxu0
      %v2744 = vadd.f32 0.0, %v2743
      %v2745 = vpop.f32.mrb[0].mxu0
      %v2746 = vadd.f32 0.0, %v2745
      %2747 = vmatprep.mubr.f32.mxu0 %v2648
      %2748 = vmatmul.mubr.f32.gmra.mrb[0].mxu0 %v2647
      %v2749 = vpop.f32.mrb[0].mxu0
      %v2750 = vadd.f32 0.0, %v2749
      %v2751 = vpop.f32.mrb[0].mxu0
      %v2752 = vadd.f32 0.0, %v2751
      %2753 = vmatprep.mubr.f32.mxu0 %v2650
      %2754 = vmatmul.mubr.f32.gmra.mrb[0].mxu0 %v2649
      %v2755 = vpop.f32.mrb[0].mxu0
      %v2756 = vadd.f32 0.0, %v2755
      %v2757 = vpop.f32.mrb[0].mxu0
      %v2758 = vadd.f32 0.0, %v2757
      %2759 = vmatprep.mubr.f32.mxu0 %v2652
      %2760 = vmatmul.mubr.f32.gmra.mrb[0].mxu0 %v2651
      %v2761 = vpop.f32.mrb[0].mxu0
      %v2762 = vadd.f32 0.0, %v2761
      %v2763 = vpop.f32.mrb[0].mxu0
      %v2764 = vadd.f32 0.0, %v2763
      %2765 = vdwg.mxu0
      %v2766 = vld [vmem:[%s5] sm:$0xff]
      %v2767 = vld [vmem:[%s5 + $0x8] sm:$0xff]
      %v2768 = vld [vmem:[%s5 + $0x10] sm:$0xff]
      %v2769 = vld [vmem:[%s5 + $0x18] sm:$0xff]
      %v2770 = vld [vmem:[%s5 + $0x20] sm:$0xff]
      %v2771 = vld [vmem:[%s5 + $0x28] sm:$0xff]
      %v2772 = vld [vmem:[%s5 + $0x30] sm:$0xff]
      %v2773 = vld [vmem:[%s5 + $0x38] sm:$0xff]
      %v2774 = vld [vmem:[%s5 + $0x40] sm:$0xff]
      %v2775 = vld [vmem:[%s5 + $0x48] sm:$0xff]
      %v2776 = vld [vmem:[%s5 + $0x50] sm:$0xff]
      %v2777 = vld [vmem:[%s5 + $0x58] sm:$0xff]
      %v2778 = vld [vmem:[%s5 + $0x60] sm:$0xff]
      %v2779 = vld [vmem:[%s5 + $0x68] sm:$0xff]
      %v2780 = vld [vmem:[%s5 + $0x70] sm:$0xff]
      %v2781 = vld [vmem:[%s5 + $0x78] sm:$0xff]
      %v2782 = vld [vmem:[%s5 + $0x80] sm:$0xff]
      %v2783 = vld [vmem:[%s5 + $0x88] sm:$0xff]
      %v2784 = vld [vmem:[%s5 + $0x90] sm:$0xff]
      %v2785 = vld [vmem:[%s5 + $0x98] sm:$0xff]
      %v2786 = vld [vmem:[%s5 + $0xa0] sm:$0xff]
      %v2787 = vld [vmem:[%s5 + $0xa8] sm:$0xff]
      %v2788 = vld [vmem:[%s5 + $0xb0] sm:$0xff]
      %v2789 = vld [vmem:[%s5 + $0xb8] sm:$0xff]
      %v2790 = vld [vmem:[%s5 + $0xc0] sm:$0xff]
      %v2791 = vld [vmem:[%s5 + $0xc8] sm:$0xff]
      %v2792 = vld [vmem:[%s5 + $0xd0] sm:$0xff]
      %v2793 = vld [vmem:[%s5 + $0xd8] sm:$0xff]
      %v2794 = vld [vmem:[%s5 + $0xe0] sm:$0xff]
      %v2795 = vld [vmem:[%s5 + $0xe8] sm:$0xff]
      %v2796 = vld [vmem:[%s5 + $0xf0] sm:$0xff]
      %v2797 = vld [vmem:[%s5 + $0xf8] sm:$0xff]
      %2798 = vmatprep.subr.mxu0 0.0
      %2799 = vmatpush1.msra.mxu0 %v2766
      %2800 = vmatprep.subr.mxu0 0.0
      %2801 = vmatpush1.msra.mxu0 %v2767
      %2802 = vmatprep.subr.mxu0 0.0
      %2803 = vmatpush1.msra.mxu0 %v2768
      %2804 = vmatprep.subr.mxu0 0.0
      %2805 = vmatpush1.msra.mxu0 %v2769
      %2806 = vmatprep.subr.mxu0 0.0
      %2807 = vmatpush1.msra.mxu0 %v2770
      %2808 = vmatprep.subr.mxu0 0.0
      %2809 = vmatpush1.msra.mxu0 %v2771
      %2810 = vmatprep.subr.mxu0 0.0
      %2811 = vmatpush1.msra.mxu0 %v2772
      %2812 = vmatprep.subr.mxu0 0.0
      %2813 = vmatpush1.msra.mxu0 %v2773
      %2814 = vmatprep.subr.mxu0 0.0
      %2815 = vmatpush1.msra.mxu0 %v2774
      %2816 = vmatprep.subr.mxu0 0.0
      %2817 = vmatpush1.msra.mxu0 %v2775
      %2818 = vmatprep.subr.mxu0 0.0
      %2819 = vmatpush1.msra.mxu0 %v2776
      %2820 = vmatprep.subr.mxu0 0.0
      %2821 = vmatpush1.msra.mxu0 %v2777
      %2822 = vmatprep.subr.mxu0 0.0
      %2823 = vmatpush1.msra.mxu0 %v2778
      %2824 = vmatprep.subr.mxu0 0.0
      %2825 = vmatpush1.msra.mxu0 %v2779
      %2826 = vmatprep.subr.mxu0 0.0
      %2827 = vmatpush1.msra.mxu0 %v2780
      %2828 = vmatprep.subr.mxu0 0.0
      %2829 = vmatpush1.msra.mxu0 %v2781
      %2830 = vmatprep.subr.mxu0 0.0
      %2831 = vmatpush1.msra.mxu0 %v2782
      %2832 = vmatprep.subr.mxu0 0.0
      %2833 = vmatpush1.msra.mxu0 %v2783
      %2834 = vmatprep.subr.mxu0 0.0
      %2835 = vmatpush1.msra.mxu0 %v2784
      %2836 = vmatprep.subr.mxu0 0.0
      %2837 = vmatpush1.msra.mxu0 %v2785
      %2838 = vmatprep.subr.mxu0 0.0
      %2839 = vmatpush1.msra.mxu0 %v2786
      %2840 = vmatprep.subr.mxu0 0.0
      %2841 = vmatpush1.msra.mxu0 %v2787
      %2842 = vmatprep.subr.mxu0 0.0
      %2843 = vmatpush1.msra.mxu0 %v2788
      %2844 = vmatprep.subr.mxu0 0.0
      %2845 = vmatpush1.msra.mxu0 %v2789
      %2846 = vmatprep.subr.mxu0 0.0
      %2847 = vmatpush1.msra.mxu0 %v2790
      %2848 = vmatprep.subr.mxu0 0.0
      %2849 = vmatpush1.msra.mxu0 %v2791
      %2850 = vmatprep.subr.mxu0 0.0
      %2851 = vmatpush1.msra.mxu0 %v2792
      %2852 = vmatprep.subr.mxu0 0.0
      %2853 = vmatpush1.msra.mxu0 %v2793
      %2854 = vmatprep.subr.mxu0 0.0
      %2855 = vmatpush1.msra.mxu0 %v2794
      %2856 = vmatprep.subr.mxu0 0.0
      %2857 = vmatpush1.msra.mxu0 %v2795
      %2858 = vmatprep.subr.mxu0 0.0
      %2859 = vmatpush1.msra.mxu0 %v2796
      %2860 = vmatprep.subr.mxu0 0.0
      %2861 = vmatpush1.msra.mxu0 %v2797
      %2862 = vmatprep.mubr.f32.mxu0 %v2722
      %2863 = vmatmul.mubr.f32.gmra.mrb[0].mxu0 %v2720
      %v2864 = vpop.f32.mrb[0].mxu0
      %v2865 = vadd.f32 0.0, %v2864
      %v2866 = vpop.f32.mrb[0].mxu0
      %2867 = vmatprep.mubr.f32.mxu0 %v2728
      %2868 = vmatmul.mubr.f32.gmra.mrb[0].mxu0 %v2726
      %v2869 = vpop.f32.mrb[0].mxu0
      %v2870 = vadd.f32 0.0, %v2869
      %v2871 = vpop.f32.mrb[0].mxu0
      %2872 = vmatprep.mubr.f32.mxu0 %v2734
      %2873 = vmatmul.mubr.f32.gmra.mrb[0].mxu0 %v2732
      %v2874 = vpop.f32.mrb[0].mxu0
      %v2875 = vadd.f32 0.0, %v2874
      %v2876 = vpop.f32.mrb[0].mxu0
      %2877 = vmatprep.mubr.f32.mxu0 %v2740
      %2878 = vmatmul.mubr.f32.gmra.mrb[0].mxu0 %v2738
      %v2879 = vpop.f32.mrb[0].mxu0
      %v2880 = vadd.f32 0.0, %v2879
      %v2881 = vpop.f32.mrb[0].mxu0
      %2882 = vmatprep.mubr.f32.mxu0 %v2746
      %2883 = vmatmul.mubr.f32.gmra.mrb[0].mxu0 %v2744
      %v2884 = vpop.f32.mrb[0].mxu0
      %v2885 = vadd.f32 0.0, %v2884
      %v2886 = vpop.f32.mrb[0].mxu0
      %2887 = vmatprep.mubr.f32.mxu0 %v2752
      %2888 = vmatmul.mubr.f32.gmra.mrb[0].mxu0 %v2750
      %v2889 = vpop.f32.mrb[0].mxu0
      %v2890 = vadd.f32 0.0, %v2889
      %v2891 = vpop.f32.mrb[0].mxu0
      %2892 = vmatprep.mubr.f32.mxu0 %v2758
      %2893 = vmatmul.mubr.f32.gmra.mrb[0].mxu0 %v2756
      %v2894 = vpop.f32.mrb[0].mxu0
      %v2895 = vadd.f32 0.0, %v2894
      %v2896 = vpop.f32.mrb[0].mxu0
      %2897 = vmatprep.mubr.f32.mxu0 %v2764
      %2898 = vmatmul.mubr.f32.gmra.mrb[0].mxu0 %v2762
      %v2899 = vpop.f32.mrb[0].mxu0
      %v2900 = vadd.f32 0.0, %v2899
      %v2901 = vpop.f32.mrb[0].mxu0
      %2902 = vdwg.mxu0
      %2903 = vst [vmem:[%s271] sm:$0xff] %v2865
      %2904 = vst [vmem:[%s271 + $0x8] sm:$0xff] %v2870
      %2905 = vst [vmem:[%s271 + $0x10] sm:$0xff] %v2875
      %2906 = vst [vmem:[%s271 + $0x18] sm:$0xff] %v2880
      %2907 = vst [vmem:[%s271 + $0x20] sm:$0xff] %v2885
      %2908 = vst [vmem:[%s271 + $0x28] sm:$0xff] %v2890
      %2909 = vst [vmem:[%s271 + $0x30] sm:$0xff] %v2895
      %2910 = vst [vmem:[%s271 + $0x38] sm:$0xf] %v2900
      %p2911 = scmp.lt.s32.totalorder %s17, 1
      %s2912 = scalar_select %p2911, %s17, 1
      %s2913 = smul.addr %s2912, 8
      %s2914 = smul.addr %s2913, 8
      %s2915 = scalar_lea.vmem %s6, %s2914
      // Predicated region
      $region45: #{_fused_eval_forward.1} parent=43 // pred_check
        %p2916 = pneg %p171
      $region46: #{_fused_eval_forward.1} parent=43 // pred_check_branch
        %2918 = sbr.rel (%p2916) target = $region48
      $region47: #{_fused_eval_forward.1} parent=43 // pred_region
        _
      $region48: #{_fused_eval_forward.1} parent=43 // pred_fallthru
        _
    $region44: #{_fused_eval_forward.1} parent=5 // pred_fallthru
      _
    %p2919 = scmp.le.s32.totalorder 2, %s12
    // Predicated region
    $region49: #{_fused_eval_forward.1} parent=5 // pred_check
      %p2920 = pneg %p2919
    $region50: #{_fused_eval_forward.1} parent=5 // pred_check_branch
      %2922 = sbr.rel (%p2920) target = $region52
    $region51: #{_fused_eval_forward.1} parent=5 // pred_region
      %s2923 = ssub.s32 %s12, 2
      // Predicated region
      $region53: #{_fused_eval_forward.1} parent=51 // pred_check
        %p2924 = pneg %p177
      $region54: #{_fused_eval_forward.1} parent=51 // pred_check_branch
        %2926 = sbr.rel (%p2924) target = $region56
      $region55: #{_fused_eval_forward.1} parent=51 // pred_region
        %p2927 = scmp.lt.s32.totalorder %s18, 1
        %s2928 = scalar_select %p2927, %s18, 1
        %s2929 = smul.addr %s2928, 8
        %s2930 = smul.addr %s2929, 8
        %s2931 = scalar_lea.vmem %s6, %s2930
      $region56: #{_fused_eval_forward.1} parent=51 // pred_fallthru
        _
    $region52: #{_fused_eval_forward.1} parent=5 // pred_fallthru
      _
  $region6: #{_fused_eval_forward.1} parent=0 // loop_footer
    %s16 = sadd.s32 1, %s12
  $region7: #{_fused_eval_forward.1} parent=0 // loop_footer_branch
    %11 = sbr.rel target = $region3
  $region8: #{_fused_eval_forward.1} parent=0 // loop_exit
    _

</llo_original>
